<compile_context>
chip_gen: v6e
topology: v6e:2x2x1
jax: 0.10.0
libtpu: 0.0.40
codegen_flags: <defaults>
</compile_context>

<pallas_src>
import numpy as np
import jax
import jax.numpy as jnp
from jax.experimental import pallas as pl
from jax.experimental.pallas import tpu as pltpu


def output_size_3d(img_size, padding, kernel_size, stride):
    return tuple(
        int(np.floor((img_size[i] + 2 * padding[i] - (kernel_size[i] - 1) - 1)
                     / stride[i] + 1))
        for i in range(3)
    )


def _round_up(x, m):
    return ((x + m - 1) // m) * m


# ---------------------------- Pallas kernels ----------------------------

def _convT_matmul_kernel(w_ref, x_ref, b_ref, o_ref):
    # out^T = relu(W @ X^T + b); W (Cout, Kpad) bf16, X^T (Kpad, tm) bf16.
    # f32 accumulate + bias + ReLU, store bf16.  Output lane dim = tm (dense).
    acc = jnp.dot(w_ref[...], x_ref[...], preferred_element_type=jnp.float32)
    o_ref[...] = jnp.maximum(acc + b_ref[...], 0.0).astype(o_ref.dtype)


def _mlp_head_kernel(x_ref, w1_ref, b1_ref, w2_ref, b2_ref, w3_ref, b3_ref,
                     o_ref, acc_ref):
    # fc1 is K-tiled (grid axis 0 is the reduction over the feature dim);
    # fc2/fc3 + biases + ReLUs run once in the finalize step (bf16 MXU inputs,
    # f32 accumulate / elementwise).
    k = pl.program_id(0)

    @pl.when(k == 0)
    def _init():
        acc_ref[...] = jnp.zeros_like(acc_ref)

    acc_ref[...] += jnp.dot(x_ref[...], w1_ref[...],
                            preferred_element_type=jnp.float32)

    @pl.when(k == pl.num_programs(0) - 1)
    def _finalize():
        h1 = jnp.maximum(acc_ref[...] + b1_ref[...], 0.0)
        h2 = jnp.maximum(
            jnp.dot(h1.astype(jnp.bfloat16), w2_ref[...],
                    preferred_element_type=jnp.float32) + b2_ref[...], 0.0)
        o_ref[...] = (jnp.dot(h2.astype(jnp.bfloat16), w3_ref[...],
                              preferred_element_type=jnp.float32)
                      + b3_ref[...])


# ------------------------------ wrappers --------------------------------

def conv_matmul_bias_relu_T(patchesT, w_co_k, bias, *, tm=2048):
    """relu(W @ patches^T + b) -> bf16 [Cout, M].

    patchesT : [K, M]  (K-major patch slab, bf16-castable)
    w_co_k   : [Cout, K]  (BN already folded)
    bias     : [Cout]
    Output lane dim is the M tile (multiple of 128) -> unmasked stores and
    full MXU column utilization; Cout=32/64 sits on sublanes.
    """
    K, M = patchesT.shape
    Cout = w_co_k.shape[0]

    # Pad K (contraction) to a multiple of 128; zero rows/cols are inert.
    K_pad = _round_up(K, 128)

    # Lane tile over M.  Keep >=2 tiles when possible so the "parallel" grid
    # axis can shard across both v7x TensorCores (no cost on v5e/v6e).
    M128 = _round_up(M, 128)
    if M128 <= tm:
        tm_eff = max(128, (M128 // 2) // 128 * 128) if M128 >= 256 else M128
    else:
        tm_eff = tm
    M_pad = _round_up(M, tm_eff)

    if K_pad != K or M_pad != M:
        patchesT = jnp.pad(patchesT, ((0, K_pad - K), (0, M_pad - M)))
    if K_pad != K:
        w_co_k = jnp.pad(w_co_k, ((0, 0), (0, K_pad - K)))

    px = patchesT.astype(jnp.bfloat16)
    wx = w_co_k.astype(jnp.bfloat16)
    b2d = bias.reshape(Cout, 1).astype(jnp.float32)

    grid = (M_pad // tm_eff,)
    cost = pl.CostEstimate(
        flops=int(2 * M_pad * K_pad * Cout),
        transcendentals=0,
        bytes_accessed=int(px.size * 2 + wx.size * 2 + Cout * M_pad * 2),
    )

    out = pl.pallas_call(
        _convT_matmul_kernel,
        out_shape=jax.ShapeDtypeStruct((Cout, M_pad), jnp.bfloat16),
        grid=grid,
        in_specs=[
            pl.BlockSpec((Cout, K_pad), lambda i: (0, 0)),   # weights resident
            pl.BlockSpec((K_pad, tm_eff), lambda i: (0, i)),  # patch slab tile
            pl.BlockSpec((Cout, 1), lambda i: (0, 0)),        # bias
        ],
        out_specs=pl.BlockSpec((Cout, tm_eff), lambda i: (0, i)),
        compiler_params=pltpu.CompilerParams(
            dimension_semantics=("parallel",),
            vmem_limit_bytes=32 * 1024 * 1024),
        cost_estimate=cost,
    )(wx, px, b2d)
    return out[:, :M] if M_pad != M else out


def mlp_head(feat, w1, b1, w2, b2, w3, b3, *, tk=1024):
    """fc1(K-tiled, f32 VMEM accumulator) -> ReLU -> fc2 -> ReLU -> fc3."""
    Nb, K = feat.shape
    H1 = w1.shape[1]
    H2 = w2.shape[1]
    C = w3.shape[1]

    Nb_pad = _round_up(max(Nb, 8), 8)
    tk_eff = min(tk, _round_up(K, 128))
    K_pad = _round_up(K, tk_eff)

    x = feat
    if Nb_pad != Nb or K_pad != K:
        x = jnp.pad(feat, ((0, Nb_pad - Nb), (0, K_pad - K)))
    w1p = jnp.pad(w1, ((0, K_pad - K), (0, 0))) if K_pad != K else w1

    xb = x.astype(jnp.bfloat16)
    w1b = w1p.astype(jnp.bfloat16)

    out = pl.pallas_call(
        _mlp_head_kernel,
        out_shape=jax.ShapeDtypeStruct((Nb_pad, C), jnp.float32),
        grid=(K_pad // tk_eff,),
        in_specs=[
            pl.BlockSpec((Nb_pad, tk_eff), lambda k: (0, k)),
            pl.BlockSpec((tk_eff, H1), lambda k: (k, 0)),
            pl.BlockSpec((1, H1), lambda k: (0, 0)),
            pl.BlockSpec((H1, H2), lambda k: (0, 0)),
            pl.BlockSpec((1, H2), lambda k: (0, 0)),
            pl.BlockSpec((H2, C), lambda k: (0, 0)),
            pl.BlockSpec((1, C), lambda k: (0, 0)),
        ],
        out_specs=pl.BlockSpec((Nb_pad, C), lambda k: (0, 0)),
        scratch_shapes=[pltpu.VMEM((Nb_pad, H1), jnp.float32)],
        compiler_params=pltpu.CompilerParams(
            dimension_semantics=("arbitrary",),
            vmem_limit_bytes=32 * 1024 * 1024),
    )(xb, w1b,
      b1.reshape(1, -1).astype(jnp.float32),
      w2.astype(jnp.bfloat16), b2.reshape(1, -1).astype(jnp.float32),
      w3.astype(jnp.bfloat16), b3.reshape(1, -1).astype(jnp.float32))
    return out[:Nb]


def im2col_3d_T(x_cf, ksize, stride):
    """Channel-first K-major im2col (JAX glue).

    x_cf: [C, N, D, H, W] -> patches^T [C*kd*kh*kw, N*Do*Ho*Wo]
    Row order (ci, dz, dy, dx) matches a PyTorch [Cout, Cin, kd, kh, kw]
    weight reshaped to [Cout, -1].
    """
    C, N, D, H, W = x_cf.shape
    kd, kh, kw = ksize
    sd, sh, sw = stride
    Do, Ho, Wo = output_size_3d((D, H, W), (0, 0, 0), ksize, stride)
    cols = []
    for dz in range(kd):
        for dy in range(kh):
            for dx in range(kw):
                cols.append(jax.lax.slice(
                    x_cf,
                    (0, 0, dz, dy, dx),
                    (C, N, dz + sd * (Do - 1) + 1, dy + sh * (Ho - 1) + 1,
                     dx + sw * (Wo - 1) + 1),
                    (1, 1, sd, sh, sw)))
    p = jnp.stack(cols, axis=1)  # [C, taps, N, Do, Ho, Wo]
    return p.reshape(C * kd * kh * kw, N * Do * Ho * Wo), (Do, Ho, Wo)


def fold_bn(w_co_k, conv_bias, gamma, beta, mean, var, eps=1e-5):
    """Fold eval-mode BatchNorm3d into the conv weight [Cout, K] / bias (f32)."""
    scale = gamma / jnp.sqrt(var + eps)
    return w_co_k * scale[:, None], (conv_bias - mean) * scale + beta


def init_params(key, image_t_frames, image_height, image_width,
                fc_hidden1, fc_hidden2, num_classes):
    ch1, ch2 = 32, 64
    k1, k2 = (5, 5, 5), (3, 3, 3)
    s1, s2 = (2, 2, 2), (2, 2, 2)
    c1 = output_size_3d((image_t_frames, image_height, image_width), (0, 0, 0), k1, s1)
    c2 = output_size_3d(c1, (0, 0, 0), k2, s2)
    mx = output_size_3d(c2, (0, 0, 0), (2, 2, 2), (2, 2, 2))
    feat_dim = ch2 * mx[0] * mx[1] * mx[2]

    keys = jax.random.split(key, 20)
    it = iter(range(20))

    def nrm(shape, scale=0.05):
        return scale * jax.random.normal(keys[next(it)], shape, jnp.float32)

    p = {}
    # conv1: PyTorch layout [Cout, Cin, kd, kh, kw] -> [Cout, Cin*kd*kh*kw]
    w = nrm((ch1, 3) + k1)
    p["conv1_w"] = w.reshape(ch1, -1)
    p["conv1_b"] = nrm((ch1,))
    p["bn1"] = (1.0 + nrm((ch1,), 0.1),            # gamma
                nrm((ch1,), 0.1),                  # beta
                nrm((ch1,), 0.1),                  # running_mean
                0.5 + jax.random.uniform(keys[next(it)], (ch1,), jnp.float32))  # running_var
    # conv2
    w = nrm((ch2, ch1) + k2)
    p["conv2_w"] = w.reshape(ch2, -1)
    p["conv2_b"] = nrm((ch2,))
    p["bn2"] = (1.0 + nrm((ch2,), 0.1),
                nrm((ch2,), 0.1),
                nrm((ch2,), 0.1),
                0.5 + jax.random.uniform(keys[next(it)], (ch2,), jnp.float32))
    # linears: PyTorch layout [out, in], stored transposed [in, out]
    p["fc1_w"] = nrm((fc_hidden1, feat_dim)).T
    p["fc1_b"] = nrm((fc_hidden1,))
    p["fc2_w"] = nrm((fc_hidden2, fc_hidden1)).T
    p["fc2_b"] = nrm((fc_hidden2,))
    p["fc3_w"] = nrm((num_classes, fc_hidden2)).T
    p["fc3_b"] = nrm((num_classes,))
    return p


def forward(params, x_ncdhw):
    N = x_ncdhw.shape[0]
    # NCDHW (PyTorch) -> channel-first [C, N, D, H, W] in bf16 (one cheap
    # leading-axis swap; the whole pipeline then stays channel-first).
    x_cf = jnp.transpose(x_ncdhw, (1, 0, 2, 3, 4)).astype(jnp.bfloat16)

    # conv1 + BN1 + ReLU   (Dropout3d is identity at inference)
    patches1, s1 = im2col_3d_T(x_cf, (5, 5, 5), (2, 2, 2))
    w1, b1 = fold_bn(params["conv1_w"], params["conv1_b"], *params["bn1"])
    y1 = conv_matmul_bias_relu_T(patches1, w1, b1).reshape(32, N, *s1)  # bf16

    # conv2 + BN2 + ReLU (input already channel-first -- no transpose needed)
    patches2, s2 = im2col_3d_T(y1, (3, 3, 3), (2, 2, 2))
    w2, b2 = fold_bn(params["conv2_w"], params["conv2_b"], *params["bn2"])
    y2 = conv_matmul_bias_relu_T(patches2, w2, b2).reshape(64, N, *s2)  # bf16

    # MaxPool3d(2): plain-JAX reshape + max (XLA fuses); floor division like
    # PyTorch (trailing odd rows/cols dropped).
    D2, H2, W2 = s2
    Dp, Hp, Wp = D2 // 2, H2 // 2, W2 // 2
    pooled = y2[:, :, :Dp * 2, :Hp * 2, :Wp * 2].reshape(
        64, N, Dp, 2, Hp, 2, Wp, 2).max(axis=(3, 5, 7))

    # flatten exactly like PyTorch x.view(N, -1) on NCDHW (channel-first order)
    feat = jnp.transpose(pooled, (1, 0, 2, 3, 4)).reshape(N, -1)

    # MLP head (Dropout between fc2 and fc3 is identity at inference)
    return mlp_head(feat,
                    params["fc1_w"], params["fc1_b"],
                    params["fc2_w"], params["fc2_b"],
                    params["fc3_w"], params["fc3_b"])


if __name__ == "__main__":
    # Small shapes consistent with the module's forward:
    #   input NCDHW = (2, 3, 16, 20, 20)
    #   conv1 -> (6,8,8), conv2 -> (2,3,3), maxpool -> (1,1,1), feat = 64
    B, C, T, H, W = 2, 3, 16, 20, 20
    FC1, FC2, NCLS = 32, 16, 4

    key = jax.random.PRNGKey(0)
    kx, kp = jax.random.split(key)
    x = jax.random.normal(kx, (B, C, T, H, W), jnp.float32)
    params = init_params(kp, T, H, W, FC1, FC2, NCLS)

    fwd = jax.jit(forward)
    out = fwd(params, x)
    jax.block_until_ready(out)
    assert out.shape == (B, NCLS), out.shape
    assert bool(jnp.all(jnp.isfinite(out)))
    print("KERNEL_OK")
</pallas_src>

<mosaic_0001>
module attributes {stable_mosaic.version = 11 : i64} {
  func.func @_convT_matmul_kernel(%arg0: i32, %arg1: memref<32x384xbf16, #tpu.memory_space<vmem>>, %arg2: memref<384x384xbf16, #tpu.memory_space<vmem>>, %arg3: memref<32x1xf32, #tpu.memory_space<vmem>>, %arg4: memref<32x384xbf16, #tpu.memory_space<vmem>>) attributes {dimension_semantics = [#tpu.dimension_semantics<parallel>], iteration_bounds = array<i64: 2>, scalar_prefetch = 0 : i64, scratch_operands = 0 : i64, tpu.core_type = #tpu.core_type<tc>, window_params = [{pipeline_mode = #tpu.pipeline_mode<synchronous>, transform_indices = @transform_0, window_bounds = array<i64: 32, 384>}, {transform_indices = @transform_1, window_bounds = array<i64: 384, 384>}, {pipeline_mode = #tpu.pipeline_mode<synchronous>, transform_indices = @transform_2, window_bounds = array<i64: 32, 1>}, {transform_indices = @transform_3, window_bounds = array<i64: 32, 384>}]} {
    %c0 = arith.constant 0 : index
    %c0_0 = arith.constant 0 : index
    %0 = vector.load %arg1[%c0, %c0_0] : memref<32x384xbf16, #tpu.memory_space<vmem>>, vector<32x384xbf16>
    %c0_1 = arith.constant 0 : index
    %c0_2 = arith.constant 0 : index
    %1 = vector.load %arg2[%c0_1, %c0_2] : memref<384x384xbf16, #tpu.memory_space<vmem>>, vector<384x384xbf16>
    %cst = arith.constant dense<0.000000e+00> : vector<32x384xf32>
    %2 = tpu.matmul %0, %1, %cst {dimension_numbers = #tpu.dot_dimension_numbers<[1], [0], [0], [1], [0, 0, 1, 1], [], []>} : vector<32x384xbf16>, vector<384x384xbf16>, vector<32x384xf32> -> vector<32x384xf32>
    %c0_3 = arith.constant 0 : index
    %c0_4 = arith.constant 0 : index
    %3 = vector.load %arg3[%c0_3, %c0_4] : memref<32x1xf32, #tpu.memory_space<vmem>>, vector<32x1xf32>
    %4 = vector.broadcast %3 : vector<32x1xf32> to vector<32x384xf32>
    %5 = arith.addf %2, %4 : vector<32x384xf32>
    %cst_5 = arith.constant 0.000000e+00 : f32
    %6 = vector.broadcast %cst_5 : f32 to vector<32x384xf32>
    %7 = arith.maximumf %5, %6 : vector<32x384xf32>
    %8 = arith.truncf %7 : vector<32x384xf32> to vector<32x384xbf16>
    %c0_6 = arith.constant 0 : index
    %c0_7 = arith.constant 0 : index
    %9 = vector.load %arg4[%c0_6, %c0_7] : memref<32x384xbf16, #tpu.memory_space<vmem>>, vector<32x384xbf16>
    tpu.vector_store %arg4[%c0_6, %c0_7], %8 {strides = array<i32>} : memref<32x384xbf16, #tpu.memory_space<vmem>>, vector<32x384xbf16>,
    return
  }
  func.func @transform_0(%arg0: i32) -> (i32, i32) {
    %c0_i32 = arith.constant 0 : i32
    %c0_i32_0 = arith.constant 0 : i32
    %c0_i32_1 = arith.constant 0 : i32
    return %c0_i32, %c0_i32_0 : i32, i32
  }
  func.func @transform_1(%arg0: i32) -> (i32, i32) {
    %c0_i32 = arith.constant 0 : i32
    %c0_i32_0 = arith.constant 0 : i32
    return %c0_i32, %arg0 : i32, i32
  }
  func.func @transform_2(%arg0: i32) -> (i32, i32) {
    %c0_i32 = arith.constant 0 : i32
    %c0_i32_0 = arith.constant 0 : i32
    %c0_i32_1 = arith.constant 0 : i32
    return %c0_i32, %c0_i32_0 : i32, i32
  }
  func.func @transform_3(%arg0: i32) -> (i32, i32) {
    %c0_i32 = arith.constant 0 : i32
    %c0_i32_0 = arith.constant 0 : i32
    return %c0_i32, %arg0 : i32, i32
  }
}

module attributes {stable_mosaic.version = 11 : i64} {
  func.func @_convT_matmul_kernel(%arg0: i32, %arg1: memref<64x896xbf16, #tpu.memory_space<vmem>>, %arg2: memref<896x128xbf16, #tpu.memory_space<vmem>>, %arg3: memref<64x1xf32, #tpu.memory_space<vmem>>, %arg4: memref<64x128xbf16, #tpu.memory_space<vmem>>) attributes {dimension_semantics = [#tpu.dimension_semantics<parallel>], iteration_bounds = array<i64: 1>, scalar_prefetch = 0 : i64, scratch_operands = 0 : i64, tpu.core_type = #tpu.core_type<tc>, window_params = [{pipeline_mode = #tpu.pipeline_mode<synchronous>, transform_indices = @transform_0, window_bounds = array<i64: 64, 896>}, {transform_indices = @transform_1, window_bounds = array<i64: 896, 128>}, {pipeline_mode = #tpu.pipeline_mode<synchronous>, transform_indices = @transform_2, window_bounds = array<i64: 64, 1>}, {transform_indices = @transform_3, window_bounds = array<i64: 64, 128>}]} {
    %c0 = arith.constant 0 : index
    %c0_0 = arith.constant 0 : index
    %0 = vector.load %arg1[%c0, %c0_0] : memref<64x896xbf16, #tpu.memory_space<vmem>>, vector<64x896xbf16>
    %c0_1 = arith.constant 0 : index
    %c0_2 = arith.constant 0 : index
    %1 = vector.load %arg2[%c0_1, %c0_2] : memref<896x128xbf16, #tpu.memory_space<vmem>>, vector<896x128xbf16>
    %cst = arith.constant dense<0.000000e+00> : vector<64x128xf32>
    %2 = tpu.matmul %0, %1, %cst {dimension_numbers = #tpu.dot_dimension_numbers<[1], [0], [0], [1], [0, 0, 1, 1], [], []>} : vector<64x896xbf16>, vector<896x128xbf16>, vector<64x128xf32> -> vector<64x128xf32>
    %c0_3 = arith.constant 0 : index
    %c0_4 = arith.constant 0 : index
    %3 = vector.load %arg3[%c0_3, %c0_4] : memref<64x1xf32, #tpu.memory_space<vmem>>, vector<64x1xf32>
    %4 = vector.broadcast %3 : vector<64x1xf32> to vector<64x128xf32>
    %5 = arith.addf %2, %4 : vector<64x128xf32>
    %cst_5 = arith.constant 0.000000e+00 : f32
    %6 = vector.broadcast %cst_5 : f32 to vector<64x128xf32>
    %7 = arith.maximumf %5, %6 : vector<64x128xf32>
    %8 = arith.truncf %7 : vector<64x128xf32> to vector<64x128xbf16>
    %c0_6 = arith.constant 0 : index
    %c0_7 = arith.constant 0 : index
    %9 = vector.load %arg4[%c0_6, %c0_7] : memref<64x128xbf16, #tpu.memory_space<vmem>>, vector<64x128xbf16>
    tpu.vector_store %arg4[%c0_6, %c0_7], %8 {strides = array<i32>} : memref<64x128xbf16, #tpu.memory_space<vmem>>, vector<64x128xbf16>,
    return
  }
  func.func @transform_0(%arg0: i32) -> (i32, i32) {
    %c0_i32 = arith.constant 0 : i32
    %c0_i32_0 = arith.constant 0 : i32
    %c0_i32_1 = arith.constant 0 : i32
    return %c0_i32, %c0_i32_0 : i32, i32
  }
  func.func @transform_1(%arg0: i32) -> (i32, i32) {
    %c0_i32 = arith.constant 0 : i32
    %c0_i32_0 = arith.constant 0 : i32
    return %c0_i32, %arg0 : i32, i32
  }
  func.func @transform_2(%arg0: i32) -> (i32, i32) {
    %c0_i32 = arith.constant 0 : i32
    %c0_i32_0 = arith.constant 0 : i32
    %c0_i32_1 = arith.constant 0 : i32
    return %c0_i32, %c0_i32_0 : i32, i32
  }
  func.func @transform_3(%arg0: i32) -> (i32, i32) {
    %c0_i32 = arith.constant 0 : i32
    %c0_i32_0 = arith.constant 0 : i32
    return %c0_i32, %arg0 : i32, i32
  }
}

module attributes {stable_mosaic.version = 11 : i64} {
  func.func @_mlp_head_kernel(%arg0: i32, %arg1: memref<8x128xbf16, #tpu.memory_space<vmem>>, %arg2: memref<128x32xbf16, #tpu.memory_space<vmem>>, %arg3: memref<1x32xf32, #tpu.memory_space<vmem>>, %arg4: memref<32x16xbf16, #tpu.memory_space<vmem>>, %arg5: memref<1x16xf32, #tpu.memory_space<vmem>>, %arg6: memref<16x4xbf16, #tpu.memory_space<vmem>>, %arg7: memref<1x4xf32, #tpu.memory_space<vmem>>, %arg8: memref<8x4xf32, #tpu.memory_space<vmem>>, %arg9: memref<8x32xf32, #tpu.memory_space<vmem>>) attributes {dimension_semantics = [#tpu.dimension_semantics<arbitrary>], iteration_bounds = array<i64: 1>, scalar_prefetch = 0 : i64, scratch_operands = 1 : i64, tpu.core_type = #tpu.core_type<tc>, window_params = [{transform_indices = @transform_0, window_bounds = array<i64: 8, 128>}, {transform_indices = @transform_1, window_bounds = array<i64: 128, 32>}, {pipeline_mode = #tpu.pipeline_mode<synchronous>, transform_indices = @transform_2, window_bounds = array<i64: 1, 32>}, {pipeline_mode = #tpu.pipeline_mode<synchronous>, transform_indices = @transform_3, window_bounds = array<i64: 32, 16>}, {pipeline_mode = #tpu.pipeline_mode<synchronous>, transform_indices = @transform_4, window_bounds = array<i64: 1, 16>}, {pipeline_mode = #tpu.pipeline_mode<synchronous>, transform_indices = @transform_5, window_bounds = array<i64: 16, 4>}, {pipeline_mode = #tpu.pipeline_mode<synchronous>, transform_indices = @transform_6, window_bounds = array<i64: 1, 4>}, {pipeline_mode = #tpu.pipeline_mode<synchronous>, transform_indices = @transform_7, window_bounds = array<i64: 8, 4>}]} {
    %c0_i32 = arith.constant 0 : i32
    %0 = arith.cmpi eq, %arg0, %c0_i32 : i32
    %1 = arith.extui %0 : i1 to i32
    %c0_i32_0 = arith.constant 0 : i32
    %2 = arith.cmpi ne, %1, %c0_i32_0 : i32
    scf.if %2 {
      %cst_10 = arith.constant 0.000000e+00 : f32
      %12 = vector.broadcast %cst_10 : f32 to vector<8x32xf32>
      %c0_11 = arith.constant 0 : index
      %c0_12 = arith.constant 0 : index
      %13 = vector.load %arg9[%c0_11, %c0_12] : memref<8x32xf32, #tpu.memory_space<vmem>>, vector<8x32xf32>
      tpu.vector_store %arg9[%c0_11, %c0_12], %12 {strides = array<i32>} : memref<8x32xf32, #tpu.memory_space<vmem>>, vector<8x32xf32>,
    } else {
    }
    %c0 = arith.constant 0 : index
    %c0_1 = arith.constant 0 : index
    %3 = vector.load %arg9[%c0, %c0_1] : memref<8x32xf32, #tpu.memory_space<vmem>>, vector<8x32xf32>
    %c0_2 = arith.constant 0 : index
    %c0_3 = arith.constant 0 : index
    %4 = vector.load %arg1[%c0_2, %c0_3] : memref<8x128xbf16, #tpu.memory_space<vmem>>, vector<8x128xbf16>
    %c0_4 = arith.constant 0 : index
    %c0_5 = arith.constant 0 : index
    %5 = vector.load %arg2[%c0_4, %c0_5] : memref<128x32xbf16, #tpu.memory_space<vmem>>, vector<128x32xbf16>
    %cst = arith.constant dense<0.000000e+00> : vector<8x32xf32>
    %6 = tpu.matmul %4, %5, %cst {dimension_numbers = #tpu.dot_dimension_numbers<[1], [0], [0], [1], [0, 0, 1, 1], [], []>} : vector<8x128xbf16>, vector<128x32xbf16>, vector<8x32xf32> -> vector<8x32xf32>
    %7 = arith.addf %3, %6 : vector<8x32xf32>
    %c0_6 = arith.constant 0 : index
    %c0_7 = arith.constant 0 : index
    %8 = vector.load %arg9[%c0_6, %c0_7] : memref<8x32xf32, #tpu.memory_space<vmem>>, vector<8x32xf32>
    tpu.vector_store %arg9[%c0_6, %c0_7], %7 {strides = array<i32>} : memref<8x32xf32, #tpu.memory_space<vmem>>, vector<8x32xf32>,
    %c0_i32_8 = arith.constant 0 : i32
    %9 = arith.cmpi eq, %arg0, %c0_i32_8 : i32
    %10 = arith.extui %9 : i1 to i32
    %c0_i32_9 = arith.constant 0 : i32
    %11 = arith.cmpi ne, %10, %c0_i32_9 : i32
    scf.if %11 {
      %c0_10 = arith.constant 0 : index
      %c0_11 = arith.constant 0 : index
      %12 = vector.load %arg9[%c0_10, %c0_11] : memref<8x32xf32, #tpu.memory_space<vmem>>, vector<8x32xf32>
      %c0_12 = arith.constant 0 : index
      %c0_13 = arith.constant 0 : index
      %13 = vector.load %arg3[%c0_12, %c0_13] : memref<1x32xf32, #tpu.memory_space<vmem>>, vector<1x32xf32>
      %14 = vector.broadcast %13 : vector<1x32xf32> to vector<8x32xf32>
      %15 = arith.addf %12, %14 : vector<8x32xf32>
      %cst_14 = arith.constant 0.000000e+00 : f32
      %16 = vector.broadcast %cst_14 : f32 to vector<8x32xf32>
      %17 = arith.maximumf %15, %16 : vector<8x32xf32>
      %18 = arith.truncf %17 : vector<8x32xf32> to vector<8x32xbf16>
      %c0_15 = arith.constant 0 : index
      %c0_16 = arith.constant 0 : index
      %19 = vector.load %arg4[%c0_15, %c0_16] : memref<32x16xbf16, #tpu.memory_space<vmem>>, vector<32x16xbf16>
      %cst_17 = arith.constant dense<0.000000e+00> : vector<8x16xf32>
      %20 = tpu.matmul %18, %19, %cst_17 {dimension_numbers = #tpu.dot_dimension_numbers<[1], [0], [0], [1], [0, 0, 1, 1], [], []>} : vector<8x32xbf16>, vector<32x16xbf16>, vector<8x16xf32> -> vector<8x16xf32>
      %c0_18 = arith.constant 0 : index
      %c0_19 = arith.constant 0 : index
      %21 = vector.load %arg5[%c0_18, %c0_19] : memref<1x16xf32, #tpu.memory_space<vmem>>, vector<1x16xf32>
      %22 = vector.broadcast %21 : vector<1x16xf32> to vector<8x16xf32>
      %23 = arith.addf %20, %22 : vector<8x16xf32>
      %cst_20 = arith.constant 0.000000e+00 : f32
      %24 = vector.broadcast %cst_20 : f32 to vector<8x16xf32>
      %25 = arith.maximumf %23, %24 : vector<8x16xf32>
      %26 = arith.truncf %25 : vector<8x16xf32> to vector<8x16xbf16>
      %c0_21 = arith.constant 0 : index
      %c0_22 = arith.constant 0 : index
      %27 = vector.load %arg6[%c0_21, %c0_22] : memref<16x4xbf16, #tpu.memory_space<vmem>>, vector<16x4xbf16>
      %cst_23 = arith.constant dense<0.000000e+00> : vector<8x4xf32>
      %28 = tpu.matmul %26, %27, %cst_23 {dimension_numbers = #tpu.dot_dimension_numbers<[1], [0], [0], [1], [0, 0, 1, 1], [], []>} : vector<8x16xbf16>, vector<16x4xbf16>, vector<8x4xf32> -> vector<8x4xf32>
      %c0_24 = arith.constant 0 : index
      %c0_25 = arith.constant 0 : index
      %29 = vector.load %arg7[%c0_24, %c0_25] : memref<1x4xf32, #tpu.memory_space<vmem>>, vector<1x4xf32>
      %30 = vector.broadcast %29 : vector<1x4xf32> to vector<8x4xf32>
      %31 = arith.addf %28, %30 : vector<8x4xf32>
      %c0_26 = arith.constant 0 : index
      %c0_27 = arith.constant 0 : index
      %32 = vector.load %arg8[%c0_26, %c0_27] : memref<8x4xf32, #tpu.memory_space<vmem>>, vector<8x4xf32>
      tpu.vector_store %arg8[%c0_26, %c0_27], %31 {strides = array<i32>} : memref<8x4xf32, #tpu.memory_space<vmem>>, vector<8x4xf32>,
    } else {
    }
    return
  }
  func.func @transform_0(%arg0: i32) -> (i32, i32) {
    %c0_i32 = arith.constant 0 : i32
    %c0_i32_0 = arith.constant 0 : i32
    return %c0_i32, %arg0 : i32, i32
  }
  func.func @transform_1(%arg0: i32) -> (i32, i32) {
    %c0_i32 = arith.constant 0 : i32
    %c0_i32_0 = arith.constant 0 : i32
    return %arg0, %c0_i32 : i32, i32
  }
  func.func @transform_2(%arg0: i32) -> (i32, i32) {
    %c0_i32 = arith.constant 0 : i32
    %c0_i32_0 = arith.constant 0 : i32
    %c0_i32_1 = arith.constant 0 : i32
    return %c0_i32, %c0_i32_0 : i32, i32
  }
  func.func @transform_3(%arg0: i32) -> (i32, i32) {
    %c0_i32 = arith.constant 0 : i32
    %c0_i32_0 = arith.constant 0 : i32
    %c0_i32_1 = arith.constant 0 : i32
    return %c0_i32, %c0_i32_0 : i32, i32
  }
  func.func @transform_4(%arg0: i32) -> (i32, i32) {
    %c0_i32 = arith.constant 0 : i32
    %c0_i32_0 = arith.constant 0 : i32
    %c0_i32_1 = arith.constant 0 : i32
    return %c0_i32, %c0_i32_0 : i32, i32
  }
  func.func @transform_5(%arg0: i32) -> (i32, i32) {
    %c0_i32 = arith.constant 0 : i32
    %c0_i32_0 = arith.constant 0 : i32
    %c0_i32_1 = arith.constant 0 : i32
    return %c0_i32, %c0_i32_0 : i32, i32
  }
  func.func @transform_6(%arg0: i32) -> (i32, i32) {
    %c0_i32 = arith.constant 0 : i32
    %c0_i32_0 = arith.constant 0 : i32
    %c0_i32_1 = arith.constant 0 : i32
    return %c0_i32, %c0_i32_0 : i32, i32
  }
  func.func @transform_7(%arg0: i32) -> (i32, i32) {
    %c0_i32 = arith.constant 0 : i32
    %c0_i32_0 = arith.constant 0 : i32
    %c0_i32_1 = arith.constant 0 : i32
    return %c0_i32, %c0_i32_0 : i32, i32
  }
}

</mosaic_0001>

<llo_original>
// kernel: forward.3
$region0: #{forward.3}
  #allocation0 [shape = 'u32[]', space=smem, size = 0x4, offset = 0x4, fixed_abs, tag = 'smem constant byte address 0x4 - core index']
  #allocation1 [shape = 'u32[144,128]{1,0:T(1,128)}', space=vmem, size = 0x12000, scoped, tag = 'internal scratch']
  %s0 = inlined_call_operand.vmem [shape: bf16[32,384], index: 0, kind: input, shape index: {}]
  %s1 = inlined_call_operand.vmem [shape: bf16[384,768], index: 1, kind: input, shape index: {}]
  %s2 = inlined_call_operand.vmem [shape: f32[32,1], index: 2, kind: input, shape index: {}]
  %s3 = inlined_call_operand.vmem [shape: bf16[32,768], index: 3, kind: output, shape index: {}]
  %s4 = sld [smem:[#allocation0]]
  $region93: #{forward.3} parent=0
    _
  %s6 = ssub.s32 1, %s4
  %s7 = scalar_select 0, %s6, %s4
  $region1: #{forward.3} parent=0
    #allocation2 [shape = 'u8[589824]{0}', space=vmem, size = 0x90000, scoped, tag = 'input window, operand 1']
    #allocation3 [shape = 'u8[49152]{0}', space=vmem, size = 0xc000, scoped, tag = 'output window, operand 0']
    loop: start=0, step=1, limit=4
    $region2: #{forward.3} parent=1 // loop_pre_header
      _
    $region3: #{forward.3} parent=1 // loop_header
      %s9 = sphi 0, %s13
      %p10 = scmp.ge.s32.totalorder %s9, 4
      %s17 = sphi 0, %s17
      %s19 = sphi 0, %s17
      %s20 = sphi 0, %s19
      %s34 = sphi 0, %s20
      %s40 = sphi 0, %s42
      %s43 = sphi 0, %s40
      %s44 = sphi 0, %s43
      %s60 = sphi 0, %s44
      %s64 = sphi 0, %s64
      %s66 = sphi 0, %s64
      %s67 = sphi 0, %s66
      %s81 = sphi 0, %s67
      %s87 = sphi 0, %s89
      %s90 = sphi 0, %s87
      %s91 = sphi 0, %s90
      %s107 = sphi 0, %s91
    $region4: #{forward.3} parent=1 // loop_header_branch
      %12 = sbr.rel (%p10) target = $region8
    $region5: #{forward.3} parent=1 // loop_body
      %s14 = ssub.s32 %s9, 1
      %s15 = ssub.s32 %s9, 2
      %s16 = sadd.s32 %s9, 1
      %s18 = sadd.s32 %s17, 1
      %p21 = scmp.eq.s32.totalorder %s9, 1
      %p22 = scmp.ne.s32.totalorder %s17, %s19
      %p23 = scmp.eq.s32.totalorder %s9, 0
      %p24 = por %p22, %p23
      %p25 = scmp.ne.s32.totalorder %s17, %s19
      %p26 = scmp.eq.s32.totalorder %s14, 1
      %p27 = por %p25, %p26
      %p28 = scmp.ne.s32.totalorder %s19, %s20
      %p29 = scmp.eq.s32.totalorder %s14, 0
      %p30 = por %p28, %p29
      %p31 = scmp.ne.s32.totalorder %s19, %s20
      %p32 = scmp.eq.s32.totalorder %s15, 1
      %p33 = por %p31, %p32
      %p35 = scmp.ne.s32.totalorder %s20, %s34
      %p36 = scmp.eq.s32.totalorder %s15, 0
      %p37 = por %p35, %p36
      %s38 = ssub.s32 %s9, %s16
      %p39 = scmp.eq.s32.totalorder %s38, 0
      %s41 = sadd.s32 %s40, 1
      %s42 = scalar_select %p39, %s40, %s41
      %p45 = pneg %p39
      %p46 = scmp.eq.s32.totalorder %s9, 1
      %p47 = por %p45, %p46
      %p48 = scmp.ne.s32.totalorder %s40, %s43
      %p49 = scmp.eq.s32.totalorder %s9, 0
      %p50 = por %p48, %p49
      %p51 = scmp.ne.s32.totalorder %s40, %s43
      %p52 = scmp.eq.s32.totalorder %s14, 1
      %p53 = por %p51, %p52
      %p54 = scmp.ne.s32.totalorder %s43, %s44
      %p55 = scmp.eq.s32.totalorder %s14, 0
      %p56 = por %p54, %p55
      %p57 = scmp.ne.s32.totalorder %s43, %s44
      %p58 = scmp.eq.s32.totalorder %s15, 1
      %p59 = por %p57, %p58
      %p61 = scmp.ne.s32.totalorder %s44, %s60
      %p62 = scmp.eq.s32.totalorder %s15, 0
      %p63 = por %p61, %p62
      %s65 = sadd.s32 %s64, 1
      %p68 = scmp.eq.s32.totalorder %s9, 1
      %p69 = scmp.ne.s32.totalorder %s64, %s66
      %p70 = scmp.eq.s32.totalorder %s9, 0
      %p71 = por %p69, %p70
      %p72 = scmp.ne.s32.totalorder %s64, %s66
      %p73 = scmp.eq.s32.totalorder %s14, 1
      %p74 = por %p72, %p73
      %p75 = scmp.ne.s32.totalorder %s66, %s67
      %p76 = scmp.eq.s32.totalorder %s14, 0
      %p77 = por %p75, %p76
      %p78 = scmp.ne.s32.totalorder %s66, %s67
      %p79 = scmp.eq.s32.totalorder %s15, 1
      %p80 = por %p78, %p79
      %p82 = scmp.ne.s32.totalorder %s67, %s81
      %p83 = scmp.eq.s32.totalorder %s15, 0
      %p84 = por %p82, %p83
      %s85 = ssub.s32 %s9, %s16
      %p86 = scmp.eq.s32.totalorder %s85, 0
      %s88 = sadd.s32 %s87, 1
      %s89 = scalar_select %p86, %s87, %s88
      %p92 = pneg %p86
      %p93 = scmp.eq.s32.totalorder %s9, 1
      %p94 = por %p92, %p93
      %p95 = scmp.ne.s32.totalorder %s87, %s90
      %p96 = scmp.eq.s32.totalorder %s9, 0
      %p97 = por %p95, %p96
      %p98 = scmp.ne.s32.totalorder %s87, %s90
      %p99 = scmp.eq.s32.totalorder %s14, 1
      %p100 = por %p98, %p99
      %p101 = scmp.ne.s32.totalorder %s90, %s91
      %p102 = scmp.eq.s32.totalorder %s14, 0
      %p103 = por %p101, %p102
      %p104 = scmp.ne.s32.totalorder %s90, %s91
      %p105 = scmp.eq.s32.totalorder %s15, 1
      %p106 = por %p104, %p105
      %p108 = scmp.ne.s32.totalorder %s91, %s107
      %p109 = scmp.eq.s32.totalorder %s15, 0
      %p110 = por %p108, %p109
      %p111 = scmp.le.s32.totalorder 1, %s9
      %p112 = scmp.lt.s32.totalorder %s9, 3
      %p113 = pnand %p111, %p112
      %p114 = pneg %p113
      // Predicated region
      $region9: #{forward.3} parent=5 // pred_check
        _
      $region10: #{forward.3} parent=5 // pred_check_branch
        %116 = sbr.rel (%p113) target = $region12
      $region11: #{forward.3} parent=5 // pred_region
        %s117 = ssub.s32 %s9, 1
        // Predicated region
        $region13: #{forward.3} parent=11 // pred_check
          %p118 = pneg %p30
        $region14: #{forward.3} parent=11 // pred_check_branch
          %120 = sbr.rel (%p118) target = $region16
        $region15: #{forward.3} parent=11 // pred_region
          _
        $region16: #{forward.3} parent=11 // pred_fallthru
          _
        // Predicated region
        $region17: #{forward.3} parent=11 // pred_check
          %p121 = pneg %p77
        $region18: #{forward.3} parent=11 // pred_check_branch
          %123 = sbr.rel (%p121) target = $region20
        $region19: #{forward.3} parent=11 // pred_region
          _
        $region20: #{forward.3} parent=11 // pred_fallthru
          _
      $region12: #{forward.3} parent=5 // pred_fallthru
        _
      %p124 = scmp.lt.s32.totalorder %s9, 2
      // Predicated region
      $region21: #{forward.3} parent=5 // pred_check
        %p125 = pneg %p124
      $region22: #{forward.3} parent=5 // pred_check_branch
        %127 = sbr.rel (%p125) target = $region24
      $region23: #{forward.3} parent=5 // pred_region
        // Predicated region
        $region25: #{forward.3} parent=23 // pred_check
          %p128 = pneg %p50
        $region26: #{forward.3} parent=23 // pred_check_branch
          %130 = sbr.rel (%p128) target = $region28
        $region27: #{forward.3} parent=23 // pred_region
          %s131 = sand.u32 %s40, 1
          %s132 = sand.u32 %s40, 1
          %s133 = smul.addr %s132, 576
          %s134 = scalar_lea.vmem [#allocation2], %s133
          %s135 = smul.u32 3, %s9
          %s136 = smul.addr %s135, 4
          %s137 = scalar_lea.vmem %s1, %s136
          // Predicated region
          $region29: #{forward.3} parent=27 // pred_check
            _
          $region30: #{forward.3} parent=27 // pred_check_branch
            %139 = sbr.rel (0) target = $region32
          $region31: #{forward.3} parent=27 // pred_region
            // Predicated region
            $region33: #{forward.3} parent=31 // pred_check
              _
            $region34: #{forward.3} parent=31 // pred_check_branch
              %141 = sbr.rel (0) target = $region36
            $region35: #{forward.3} parent=31 // pred_region
              %s142 = scalar_lea.vmem %s137, 8
              %s143 = scalar_lea.vmem %s134, 8 [#allocation2]
              loop: start=0, step=1, limit=1
              $region37: #{forward.3} parent=35 // loop_pre_header
                _
              $region38: #{forward.3} parent=35 // loop_header
                %s145 = sphi 0, %s149
                %p146 = scmp.ge.s32.totalorder %s145, 1
                %s150 = sphi %s137, %s137
                %s151 = sphi %s134, %s134
              $region39: #{forward.3} parent=35 // loop_header_branch
                %148 = sbr.rel (%p146) target = $region43
              $region40: #{forward.3} parent=35 // loop_body
                %v152 = vld [vmem:[%s150] sm:$0xff]
                %153 = vst [vmem:[%s151] sm:$0xff] %v152
                %v154 = vld [vmem:[%s150 + $0x18] sm:$0xff]
                %155 = vst [vmem:[%s151 + $0xc] sm:$0xff] %v154
                %v156 = vld [vmem:[%s150 + $0x30] sm:$0xff]
                %157 = vst [vmem:[%s151 + $0x18] sm:$0xff] %v156
                %v158 = vld [vmem:[%s150 + $0x48] sm:$0xff]
                %159 = vst [vmem:[%s151 + $0x24] sm:$0xff] %v158
                %v160 = vld [vmem:[%s150 + $0x60] sm:$0xff]
                %161 = vst [vmem:[%s151 + $0x30] sm:$0xff] %v160
                %v162 = vld [vmem:[%s150 + $0x78] sm:$0xff]
                %163 = vst [vmem:[%s151 + $0x3c] sm:$0xff] %v162
                %v164 = vld [vmem:[%s150 + $0x90] sm:$0xff]
                %165 = vst [vmem:[%s151 + $0x48] sm:$0xff] %v164
                %v166 = vld [vmem:[%s150 + $0xa8] sm:$0xff]
                %167 = vst [vmem:[%s151 + $0x54] sm:$0xff] %v166
                %v168 = vld [vmem:[%s150 + $0xc0] sm:$0xff]
                %169 = vst [vmem:[%s151 + $0x60] sm:$0xff] %v168
                %v170 = vld [vmem:[%s150 + $0xd8] sm:$0xff]
                %171 = vst [vmem:[%s151 + $0x6c] sm:$0xff] %v170
                %v172 = vld [vmem:[%s150 + $0xf0] sm:$0xff]
                %173 = vst [vmem:[%s151 + $0x78] sm:$0xff] %v172
                %v174 = vld [vmem:[%s150 + $0x108] sm:$0xff]
                %175 = vst [vmem:[%s151 + $0x84] sm:$0xff] %v174
                %v176 = vld [vmem:[%s150 + $0x120] sm:$0xff]
                %177 = vst [vmem:[%s151 + $0x90] sm:$0xff] %v176
                %v178 = vld [vmem:[%s150 + $0x138] sm:$0xff]
                %179 = vst [vmem:[%s151 + $0x9c] sm:$0xff] %v178
                %v180 = vld [vmem:[%s150 + $0x150] sm:$0xff]
                %181 = vst [vmem:[%s151 + $0xa8] sm:$0xff] %v180
                %v182 = vld [vmem:[%s150 + $0x168] sm:$0xff]
                %183 = vst [vmem:[%s151 + $0xb4] sm:$0xff] %v182
                %v184 = vld [vmem:[%s150 + $0x180] sm:$0xff]
                %185 = vst [vmem:[%s151 + $0xc0] sm:$0xff] %v184
                %v186 = vld [vmem:[%s150 + $0x198] sm:$0xff]
                %187 = vst [vmem:[%s151 + $0xcc] sm:$0xff] %v186
                %v188 = vld [vmem:[%s150 + $0x1b0] sm:$0xff]
                %189 = vst [vmem:[%s151 + $0xd8] sm:$0xff] %v188
                %v190 = vld [vmem:[%s150 + $0x1c8] sm:$0xff]
                %191 = vst [vmem:[%s151 + $0xe4] sm:$0xff] %v190
                %v192 = vld [vmem:[%s150 + $0x1e0] sm:$0xff]
                %193 = vst [vmem:[%s151 + $0xf0] sm:$0xff] %v192
                %v194 = vld [vmem:[%s150 + $0x1f8] sm:$0xff]
                %195 = vst [vmem:[%s151 + $0xfc] sm:$0xff] %v194
                %v196 = vld [vmem:[%s150 + $0x210] sm:$0xff]
                %197 = vst [vmem:[%s151 + $0x108] sm:$0xff] %v196
                %v198 = vld [vmem:[%s150 + $0x228] sm:$0xff]
                %199 = vst [vmem:[%s151 + $0x114] sm:$0xff] %v198
                %v200 = vld [vmem:[%s150 + $0x240] sm:$0xff]
                %201 = vst [vmem:[%s151 + $0x120] sm:$0xff] %v200
                %v202 = vld [vmem:[%s150 + $0x258] sm:$0xff]
                %203 = vst [vmem:[%s151 + $0x12c] sm:$0xff] %v202
                %v204 = vld [vmem:[%s150 + $0x270] sm:$0xff]
                %205 = vst [vmem:[%s151 + $0x138] sm:$0xff] %v204
                %v206 = vld [vmem:[%s150 + $0x288] sm:$0xff]
                %207 = vst [vmem:[%s151 + $0x144] sm:$0xff] %v206
                %v208 = vld [vmem:[%s150 + $0x2a0] sm:$0xff]
                %209 = vst [vmem:[%s151 + $0x150] sm:$0xff] %v208
                %v210 = vld [vmem:[%s150 + $0x2b8] sm:$0xff]
                %211 = vst [vmem:[%s151 + $0x15c] sm:$0xff] %v210
                %v212 = vld [vmem:[%s150 + $0x2d0] sm:$0xff]
                %213 = vst [vmem:[%s151 + $0x168] sm:$0xff] %v212
                %v214 = vld [vmem:[%s150 + $0x2e8] sm:$0xff]
                %215 = vst [vmem:[%s151 + $0x174] sm:$0xff] %v214
                %v216 = vld [vmem:[%s150 + $0x300] sm:$0xff]
                %217 = vst [vmem:[%s151 + $0x180] sm:$0xff] %v216
                %v218 = vld [vmem:[%s150 + $0x318] sm:$0xff]
                %219 = vst [vmem:[%s151 + $0x18c] sm:$0xff] %v218
                %v220 = vld [vmem:[%s150 + $0x330] sm:$0xff]
                %221 = vst [vmem:[%s151 + $0x198] sm:$0xff] %v220
                %v222 = vld [vmem:[%s150 + $0x348] sm:$0xff]
                %223 = vst [vmem:[%s151 + $0x1a4] sm:$0xff] %v222
                %v224 = vld [vmem:[%s150 + $0x360] sm:$0xff]
                %225 = vst [vmem:[%s151 + $0x1b0] sm:$0xff] %v224
                %v226 = vld [vmem:[%s150 + $0x378] sm:$0xff]
                %227 = vst [vmem:[%s151 + $0x1bc] sm:$0xff] %v226
                %v228 = vld [vmem:[%s150 + $0x390] sm:$0xff]
                %229 = vst [vmem:[%s151 + $0x1c8] sm:$0xff] %v228
                %v230 = vld [vmem:[%s150 + $0x3a8] sm:$0xff]
                %231 = vst [vmem:[%s151 + $0x1d4] sm:$0xff] %v230
                %v232 = vld [vmem:[%s150 + $0x3c0] sm:$0xff]
                %233 = vst [vmem:[%s151 + $0x1e0] sm:$0xff] %v232
                %v234 = vld [vmem:[%s150 + $0x3d8] sm:$0xff]
                %235 = vst [vmem:[%s151 + $0x1ec] sm:$0xff] %v234
                %v236 = vld [vmem:[%s150 + $0x3f0] sm:$0xff]
                %237 = vst [vmem:[%s151 + $0x1f8] sm:$0xff] %v236
                %v238 = vld [vmem:[%s150 + $0x408] sm:$0xff]
                %239 = vst [vmem:[%s151 + $0x204] sm:$0xff] %v238
                %v240 = vld [vmem:[%s150 + $0x420] sm:$0xff]
                %241 = vst [vmem:[%s151 + $0x210] sm:$0xff] %v240
                %v242 = vld [vmem:[%s150 + $0x438] sm:$0xff]
                %243 = vst [vmem:[%s151 + $0x21c] sm:$0xff] %v242
                %v244 = vld [vmem:[%s150 + $0x450] sm:$0xff]
                %245 = vst [vmem:[%s151 + $0x228] sm:$0xff] %v244
                %v246 = vld [vmem:[%s150 + $0x468] sm:$0xff]
                %247 = vst [vmem:[%s151 + $0x234] sm:$0xff] %v246
              $region41: #{forward.3} parent=35 // loop_footer
                %s149 = sadd.s32 1, %s145
              $region42: #{forward.3} parent=35 // loop_footer_branch
                %144 = sbr.rel target = $region38
              $region43: #{forward.3} parent=35 // loop_exit
                _
              %s249 = ssub.s32 16, 1
              loop: start=0, step=1, limit=1
              $region44: #{forward.3} parent=35 // loop_pre_header
                _
              $region45: #{forward.3} parent=35 // loop_header
                %s251 = sphi 0, %s255
                %p252 = scmp.ge.s32.totalorder %s251, 1
                %s256 = sphi %s142, %s142
                %s257 = sphi %s143, %s143
              $region46: #{forward.3} parent=35 // loop_header_branch
                %254 = sbr.rel (%p252) target = $region50
              $region47: #{forward.3} parent=35 // loop_body
                %v258 = vld [vmem:[%s256] sm:%s249]
                %259 = vst [vmem:[%s257] sm:%s249] %v258
                %v260 = vld [vmem:[%s256 + $0x18] sm:%s249]
                %261 = vst [vmem:[%s257 + $0xc] sm:%s249] %v260
                %v262 = vld [vmem:[%s256 + $0x30] sm:%s249]
                %263 = vst [vmem:[%s257 + $0x18] sm:%s249] %v262
                %v264 = vld [vmem:[%s256 + $0x48] sm:%s249]
                %265 = vst [vmem:[%s257 + $0x24] sm:%s249] %v264
                %v266 = vld [vmem:[%s256 + $0x60] sm:%s249]
                %267 = vst [vmem:[%s257 + $0x30] sm:%s249] %v266
                %v268 = vld [vmem:[%s256 + $0x78] sm:%s249]
                %269 = vst [vmem:[%s257 + $0x3c] sm:%s249] %v268
                %v270 = vld [vmem:[%s256 + $0x90] sm:%s249]
                %271 = vst [vmem:[%s257 + $0x48] sm:%s249] %v270
                %v272 = vld [vmem:[%s256 + $0xa8] sm:%s249]
                %273 = vst [vmem:[%s257 + $0x54] sm:%s249] %v272
                %v274 = vld [vmem:[%s256 + $0xc0] sm:%s249]
                %275 = vst [vmem:[%s257 + $0x60] sm:%s249] %v274
                %v276 = vld [vmem:[%s256 + $0xd8] sm:%s249]
                %277 = vst [vmem:[%s257 + $0x6c] sm:%s249] %v276
                %v278 = vld [vmem:[%s256 + $0xf0] sm:%s249]
                %279 = vst [vmem:[%s257 + $0x78] sm:%s249] %v278
                %v280 = vld [vmem:[%s256 + $0x108] sm:%s249]
                %281 = vst [vmem:[%s257 + $0x84] sm:%s249] %v280
                %v282 = vld [vmem:[%s256 + $0x120] sm:%s249]
                %283 = vst [vmem:[%s257 + $0x90] sm:%s249] %v282
                %v284 = vld [vmem:[%s256 + $0x138] sm:%s249]
                %285 = vst [vmem:[%s257 + $0x9c] sm:%s249] %v284
                %v286 = vld [vmem:[%s256 + $0x150] sm:%s249]
                %287 = vst [vmem:[%s257 + $0xa8] sm:%s249] %v286
                %v288 = vld [vmem:[%s256 + $0x168] sm:%s249]
                %289 = vst [vmem:[%s257 + $0xb4] sm:%s249] %v288
                %v290 = vld [vmem:[%s256 + $0x180] sm:%s249]
                %291 = vst [vmem:[%s257 + $0xc0] sm:%s249] %v290
                %v292 = vld [vmem:[%s256 + $0x198] sm:%s249]
                %293 = vst [vmem:[%s257 + $0xcc] sm:%s249] %v292
                %v294 = vld [vmem:[%s256 + $0x1b0] sm:%s249]
                %295 = vst [vmem:[%s257 + $0xd8] sm:%s249] %v294
                %v296 = vld [vmem:[%s256 + $0x1c8] sm:%s249]
                %297 = vst [vmem:[%s257 + $0xe4] sm:%s249] %v296
                %v298 = vld [vmem:[%s256 + $0x1e0] sm:%s249]
                %299 = vst [vmem:[%s257 + $0xf0] sm:%s249] %v298
                %v300 = vld [vmem:[%s256 + $0x1f8] sm:%s249]
                %301 = vst [vmem:[%s257 + $0xfc] sm:%s249] %v300
                %v302 = vld [vmem:[%s256 + $0x210] sm:%s249]
                %303 = vst [vmem:[%s257 + $0x108] sm:%s249] %v302
                %v304 = vld [vmem:[%s256 + $0x228] sm:%s249]
                %305 = vst [vmem:[%s257 + $0x114] sm:%s249] %v304
                %v306 = vld [vmem:[%s256 + $0x240] sm:%s249]
                %307 = vst [vmem:[%s257 + $0x120] sm:%s249] %v306
                %v308 = vld [vmem:[%s256 + $0x258] sm:%s249]
                %309 = vst [vmem:[%s257 + $0x12c] sm:%s249] %v308
                %v310 = vld [vmem:[%s256 + $0x270] sm:%s249]
                %311 = vst [vmem:[%s257 + $0x138] sm:%s249] %v310
                %v312 = vld [vmem:[%s256 + $0x288] sm:%s249]
                %313 = vst [vmem:[%s257 + $0x144] sm:%s249] %v312
                %v314 = vld [vmem:[%s256 + $0x2a0] sm:%s249]
                %315 = vst [vmem:[%s257 + $0x150] sm:%s249] %v314
                %v316 = vld [vmem:[%s256 + $0x2b8] sm:%s249]
                %317 = vst [vmem:[%s257 + $0x15c] sm:%s249] %v316
                %v318 = vld [vmem:[%s256 + $0x2d0] sm:%s249]
                %319 = vst [vmem:[%s257 + $0x168] sm:%s249] %v318
                %v320 = vld [vmem:[%s256 + $0x2e8] sm:%s249]
                %321 = vst [vmem:[%s257 + $0x174] sm:%s249] %v320
                %v322 = vld [vmem:[%s256 + $0x300] sm:%s249]
                %323 = vst [vmem:[%s257 + $0x180] sm:%s249] %v322
                %v324 = vld [vmem:[%s256 + $0x318] sm:%s249]
                %325 = vst [vmem:[%s257 + $0x18c] sm:%s249] %v324
                %v326 = vld [vmem:[%s256 + $0x330] sm:%s249]
                %327 = vst [vmem:[%s257 + $0x198] sm:%s249] %v326
                %v328 = vld [vmem:[%s256 + $0x348] sm:%s249]
                %329 = vst [vmem:[%s257 + $0x1a4] sm:%s249] %v328
                %v330 = vld [vmem:[%s256 + $0x360] sm:%s249]
                %331 = vst [vmem:[%s257 + $0x1b0] sm:%s249] %v330
                %v332 = vld [vmem:[%s256 + $0x378] sm:%s249]
                %333 = vst [vmem:[%s257 + $0x1bc] sm:%s249] %v332
                %v334 = vld [vmem:[%s256 + $0x390] sm:%s249]
                %335 = vst [vmem:[%s257 + $0x1c8] sm:%s249] %v334
                %v336 = vld [vmem:[%s256 + $0x3a8] sm:%s249]
                %337 = vst [vmem:[%s257 + $0x1d4] sm:%s249] %v336
                %v338 = vld [vmem:[%s256 + $0x3c0] sm:%s249]
                %339 = vst [vmem:[%s257 + $0x1e0] sm:%s249] %v338
                %v340 = vld [vmem:[%s256 + $0x3d8] sm:%s249]
                %341 = vst [vmem:[%s257 + $0x1ec] sm:%s249] %v340
                %v342 = vld [vmem:[%s256 + $0x3f0] sm:%s249]
                %343 = vst [vmem:[%s257 + $0x1f8] sm:%s249] %v342
                %v344 = vld [vmem:[%s256 + $0x408] sm:%s249]
                %345 = vst [vmem:[%s257 + $0x204] sm:%s249] %v344
                %v346 = vld [vmem:[%s256 + $0x420] sm:%s249]
                %347 = vst [vmem:[%s257 + $0x210] sm:%s249] %v346
                %v348 = vld [vmem:[%s256 + $0x438] sm:%s249]
                %349 = vst [vmem:[%s257 + $0x21c] sm:%s249] %v348
                %v350 = vld [vmem:[%s256 + $0x450] sm:%s249]
                %351 = vst [vmem:[%s257 + $0x228] sm:%s249] %v350
                %v352 = vld [vmem:[%s256 + $0x468] sm:%s249]
                %353 = vst [vmem:[%s257 + $0x234] sm:%s249] %v352
              $region48: #{forward.3} parent=35 // loop_footer
                %s255 = sadd.s32 1, %s251
              $region49: #{forward.3} parent=35 // loop_footer_branch
                %250 = sbr.rel target = $region45
              $region50: #{forward.3} parent=35 // loop_exit
                _
            $region36: #{forward.3} parent=31 // pred_fallthru
              _
          $region32: #{forward.3} parent=27 // pred_fallthru
            _
          %354 = vnop
        $region28: #{forward.3} parent=23 // pred_fallthru
          _
      $region24: #{forward.3} parent=5 // pred_fallthru
        _
      %p355 = scmp.le.s32.totalorder 1, %s9
      %p356 = scmp.lt.s32.totalorder %s9, 3
      %p357 = pnand %p355, %p356
      %p358 = pneg %p357
      // Predicated region
      $region51: #{forward.3} parent=5 // pred_check
        _
      $region52: #{forward.3} parent=5 // pred_check_branch
        %360 = sbr.rel (%p357) target = $region54
      $region53: #{forward.3} parent=5 // pred_region
        %s361 = ssub.s32 %s9, 1
        %s362 = sand.u32 %s43, 1
        %s363 = sand.u32 %s43, 1
        %s364 = smul.addr %s363, 576
        %s365 = scalar_lea.vmem [#allocation2], %s364
        // Predicated region
        $region55: #{forward.3} parent=53 // pred_check
          %p366 = pneg %p56
        $region56: #{forward.3} parent=53 // pred_check_branch
          %368 = sbr.rel (%p366) target = $region58
        $region57: #{forward.3} parent=53 // pred_region
          _
        $region58: #{forward.3} parent=53 // pred_fallthru
          _
        %p369 = pneg %p30
        %p370 = pneg %p27
        %s371 = sand.u32 %s43, 1
        %s372 = sand.u32 %s43, 1
        %s373 = smul.addr %s372, 576
        %s374 = scalar_lea.vmem [#allocation2], %s373
        %p375 = pneg %p56
        %p376 = pneg %p53
        %p377 = pneg %p77
        %p378 = pneg %p74
        %p379 = pneg %p103
        %p380 = pneg %p100
        %s381 = sand.u32 %s90, 1
        %s382 = sand.u32 %s90, 1
        %s383 = smul.addr %s382, 48
        %s384 = scalar_lea.vmem [#allocation3], %s383
        %s385 = smul.u32 3, %s14
        %s386 = smul.u32 3, %s14
        %v388 = vld [vmem:[%s0] sm:$0xff]
        %v389 = vld [vmem:[%s0 + $0x8] sm:$0xf]
        %v390 = vld [vmem:[%s0 + $0xc] sm:$0xff]
        %v391 = vld [vmem:[%s0 + $0x14] sm:$0xf]
        %v392 = vld [vmem:[%s0 + $0x18] sm:$0xff]
        %v393 = vld [vmem:[%s0 + $0x20] sm:$0xf]
        %v394 = vld [vmem:[%s0 + $0x24] sm:$0xff]
        %v395 = vld [vmem:[%s0 + $0x2c] sm:$0xf]
        %v396 = vld [vmem:[%s365] sm:$0xff]
        %v397 = vld [vmem:[%s365 + $0x8] sm:$0xf]
        %v398 = vld [vmem:[%s365 + $0xc] sm:$0xff]
        %v399 = vld [vmem:[%s365 + $0x14] sm:$0xf]
        %v400 = vld [vmem:[%s365 + $0x18] sm:$0xff]
        %v401 = vld [vmem:[%s365 + $0x20] sm:$0xf]
        %v402 = vld [vmem:[%s365 + $0x24] sm:$0xff]
        %v403 = vld [vmem:[%s365 + $0x2c] sm:$0xf]
        %v404 = vld [vmem:[%s365 + $0x30] sm:$0xff]
        %v405 = vld [vmem:[%s365 + $0x38] sm:$0xf]
        %v406 = vld [vmem:[%s365 + $0x3c] sm:$0xff]
        %v407 = vld [vmem:[%s365 + $0x44] sm:$0xf]
        %v408 = vld [vmem:[%s365 + $0x48] sm:$0xff]
        %v409 = vld [vmem:[%s365 + $0x50] sm:$0xf]
        %v410 = vld [vmem:[%s365 + $0x54] sm:$0xff]
        %v411 = vld [vmem:[%s365 + $0x5c] sm:$0xf]
        %v412 = vld [vmem:[%s365 + $0x60] sm:$0xff]
        %v413 = vld [vmem:[%s365 + $0x68] sm:$0xf]
        %v414 = vld [vmem:[%s365 + $0x6c] sm:$0xff]
        %v415 = vld [vmem:[%s365 + $0x74] sm:$0xf]
        %v416 = vld [vmem:[%s365 + $0x78] sm:$0xff]
        %v417 = vld [vmem:[%s365 + $0x80] sm:$0xf]
        %v418 = vld [vmem:[%s365 + $0x84] sm:$0xff]
        %v419 = vld [vmem:[%s365 + $0x8c] sm:$0xf]
        %v420 = vld [vmem:[%s365 + $0x90] sm:$0xff]
        %v421 = vld [vmem:[%s365 + $0x98] sm:$0xf]
        %v422 = vld [vmem:[%s365 + $0x9c] sm:$0xff]
        %v423 = vld [vmem:[%s365 + $0xa4] sm:$0xf]
        %v424 = vld [vmem:[%s365 + $0xa8] sm:$0xff]
        %v425 = vld [vmem:[%s365 + $0xb0] sm:$0xf]
        %v426 = vld [vmem:[%s365 + $0xb4] sm:$0xff]
        %v427 = vld [vmem:[%s365 + $0xbc] sm:$0xf]
        %v428 = vld [vmem:[%s365 + $0xc0] sm:$0xff]
        %v429 = vld [vmem:[%s365 + $0xc8] sm:$0xf]
        %v430 = vld [vmem:[%s365 + $0xcc] sm:$0xff]
        %v431 = vld [vmem:[%s365 + $0xd4] sm:$0xf]
        %v432 = vld [vmem:[%s365 + $0xd8] sm:$0xff]
        %v433 = vld [vmem:[%s365 + $0xe0] sm:$0xf]
        %v434 = vld [vmem:[%s365 + $0xe4] sm:$0xff]
        %v435 = vld [vmem:[%s365 + $0xec] sm:$0xf]
        %v436 = vld [vmem:[%s365 + $0xf0] sm:$0xff]
        %v437 = vld [vmem:[%s365 + $0xf8] sm:$0xf]
        %v438 = vld [vmem:[%s365 + $0xfc] sm:$0xff]
        %v439 = vld [vmem:[%s365 + $0x104] sm:$0xf]
        %v440 = vld [vmem:[%s365 + $0x108] sm:$0xff]
        %v441 = vld [vmem:[%s365 + $0x110] sm:$0xf]
        %v442 = vld [vmem:[%s365 + $0x114] sm:$0xff]
        %v443 = vld [vmem:[%s365 + $0x11c] sm:$0xf]
        %v444 = vld [vmem:[%s365 + $0x120] sm:$0xff]
        %v445 = vld [vmem:[%s365 + $0x128] sm:$0xf]
        %v446 = vld [vmem:[%s365 + $0x12c] sm:$0xff]
        %v447 = vld [vmem:[%s365 + $0x134] sm:$0xf]
        %v448 = vld [vmem:[%s365 + $0x138] sm:$0xff]
        %v449 = vld [vmem:[%s365 + $0x140] sm:$0xf]
        %v450 = vld [vmem:[%s365 + $0x144] sm:$0xff]
        %v451 = vld [vmem:[%s365 + $0x14c] sm:$0xf]
        %v452 = vld [vmem:[%s365 + $0x150] sm:$0xff]
        %v453 = vld [vmem:[%s365 + $0x158] sm:$0xf]
        %v454 = vld [vmem:[%s365 + $0x15c] sm:$0xff]
        %v455 = vld [vmem:[%s365 + $0x164] sm:$0xf]
        %v456 = vld [vmem:[%s365 + $0x168] sm:$0xff]
        %v457 = vld [vmem:[%s365 + $0x170] sm:$0xf]
        %v458 = vld [vmem:[%s365 + $0x174] sm:$0xff]
        %v459 = vld [vmem:[%s365 + $0x17c] sm:$0xf]
        %v460 = vld [vmem:[%s365 + $0x180] sm:$0xff]
        %v461 = vld [vmem:[%s365 + $0x188] sm:$0xf]
        %v462 = vld [vmem:[%s365 + $0x18c] sm:$0xff]
        %v463 = vld [vmem:[%s365 + $0x194] sm:$0xf]
        %v464 = vld [vmem:[%s365 + $0x198] sm:$0xff]
        %v465 = vld [vmem:[%s365 + $0x1a0] sm:$0xf]
        %v466 = vld [vmem:[%s365 + $0x1a4] sm:$0xff]
        %v467 = vld [vmem:[%s365 + $0x1ac] sm:$0xf]
        %v468 = vld [vmem:[%s365 + $0x1b0] sm:$0xff]
        %v469 = vld [vmem:[%s365 + $0x1b8] sm:$0xf]
        %v470 = vld [vmem:[%s365 + $0x1bc] sm:$0xff]
        %v471 = vld [vmem:[%s365 + $0x1c4] sm:$0xf]
        %v472 = vld [vmem:[%s365 + $0x1c8] sm:$0xff]
        %v473 = vld [vmem:[%s365 + $0x1d0] sm:$0xf]
        %v474 = vld [vmem:[%s365 + $0x1d4] sm:$0xff]
        %v475 = vld [vmem:[%s365 + $0x1dc] sm:$0xf]
        %v476 = vld [vmem:[%s365 + $0x1e0] sm:$0xff]
        %v477 = vld [vmem:[%s365 + $0x1e8] sm:$0xf]
        %v478 = vld [vmem:[%s365 + $0x1ec] sm:$0xff]
        %v479 = vld [vmem:[%s365 + $0x1f4] sm:$0xf]
        %v480 = vld [vmem:[%s365 + $0x1f8] sm:$0xff]
        %v481 = vld [vmem:[%s365 + $0x200] sm:$0xf]
        %v482 = vld [vmem:[%s365 + $0x204] sm:$0xff]
        %v483 = vld [vmem:[%s365 + $0x20c] sm:$0xf]
        %v484 = vld [vmem:[%s365 + $0x210] sm:$0xff]
        %v485 = vld [vmem:[%s365 + $0x218] sm:$0xf]
        %v486 = vld [vmem:[%s365 + $0x21c] sm:$0xff]
        %v487 = vld [vmem:[%s365 + $0x224] sm:$0xf]
        %v488 = vld [vmem:[%s365 + $0x228] sm:$0xff]
        %v489 = vld [vmem:[%s365 + $0x230] sm:$0xf]
        %v490 = vld [vmem:[%s365 + $0x234] sm:$0xff]
        %v491 = vld [vmem:[%s365 + $0x23c] sm:$0xf]
        %v492 = vld [vmem:[%s2] sm:$0xff]
        %v493 = vld [vmem:[%s2 + $0x8] sm:$0xff]
        %v494 = vld [vmem:[%s2 + $0x10] sm:$0xff]
        %v495 = vld [vmem:[%s2 + $0x18] sm:$0xff]
        %497 = vset.pattern.permute.xlu0 0
        %498 = vperm.xlu0 %497, %v492
        %v499 = vpop.permute.xlu0 %498
        %502 = vset.pattern.permute.xlu0 0
        %503 = vperm.xlu0 %502, %v493
        %v504 = vpop.permute.xlu0 %503
        %507 = vset.pattern.permute.xlu0 0
        %508 = vperm.xlu0 %507, %v494
        %v509 = vpop.permute.xlu0 %508
        %512 = vset.pattern.permute.xlu0 0
        %513 = vperm.xlu0 %512, %v495
        %v514 = vpop.permute.xlu0 %513
        %v524 = vunpack.c.l.b16 %v388
        %v525 = vunpack.c.h.b16 %v388
        %v526 = vunpack.c.l.b16 %v389
        %v527 = vunpack.c.l.b16 %v390
        %v528 = vunpack.c.h.b16 %v390
        %v529 = vunpack.c.l.b16 %v391
        %v530 = vunpack.c.l.b16 %v392
        %v531 = vunpack.c.h.b16 %v392
        %v532 = vunpack.c.l.b16 %v393
        %v533 = vunpack.c.l.b16 %v394
        %v534 = vunpack.c.h.b16 %v394
        %v535 = vunpack.c.l.b16 %v395
        %v536 = vpack.c.b16 %v527, %v524
        %v537 = vpack.c.b16 %v528, %v525
        %v538 = vpack.c.b16 %v529, %v526
        %v539 = vpack.c.b16 %v533, %v530
        %v540 = vpack.c.b16 %v534, %v531
        %v541 = vpack.c.b16 %v535, %v532
        %v644 = vunpack.c.l.b16 %v396
        %v645 = vunpack.c.h.b16 %v396
        %v646 = vunpack.c.l.b16 %v397
        %v647 = vunpack.c.l.b16 %v398
        %v648 = vunpack.c.h.b16 %v398
        %v649 = vunpack.c.l.b16 %v399
        %v650 = vunpack.c.l.b16 %v400
        %v651 = vunpack.c.h.b16 %v400
        %v652 = vunpack.c.l.b16 %v401
        %v653 = vunpack.c.l.b16 %v402
        %v654 = vunpack.c.h.b16 %v402
        %v655 = vunpack.c.l.b16 %v403
        %v656 = vunpack.c.l.b16 %v404
        %v657 = vunpack.c.h.b16 %v404
        %v658 = vunpack.c.l.b16 %v405
        %v659 = vunpack.c.l.b16 %v406
        %v660 = vunpack.c.h.b16 %v406
        %v661 = vunpack.c.l.b16 %v407
        %v662 = vunpack.c.l.b16 %v408
        %v663 = vunpack.c.h.b16 %v408
        %v664 = vunpack.c.l.b16 %v409
        %v665 = vunpack.c.l.b16 %v410
        %v666 = vunpack.c.h.b16 %v410
        %v667 = vunpack.c.l.b16 %v411
        %v668 = vunpack.c.l.b16 %v412
        %v669 = vunpack.c.h.b16 %v412
        %v670 = vunpack.c.l.b16 %v413
        %v671 = vunpack.c.l.b16 %v414
        %v672 = vunpack.c.h.b16 %v414
        %v673 = vunpack.c.l.b16 %v415
        %v674 = vunpack.c.l.b16 %v416
        %v675 = vunpack.c.h.b16 %v416
        %v676 = vunpack.c.l.b16 %v417
        %v677 = vunpack.c.l.b16 %v418
        %v678 = vunpack.c.h.b16 %v418
        %v679 = vunpack.c.l.b16 %v419
        %v680 = vunpack.c.l.b16 %v420
        %v681 = vunpack.c.h.b16 %v420
        %v682 = vunpack.c.l.b16 %v421
        %v683 = vunpack.c.l.b16 %v422
        %v684 = vunpack.c.h.b16 %v422
        %v685 = vunpack.c.l.b16 %v423
        %v686 = vunpack.c.l.b16 %v424
        %v687 = vunpack.c.h.b16 %v424
        %v688 = vunpack.c.l.b16 %v425
        %v689 = vunpack.c.l.b16 %v426
        %v690 = vunpack.c.h.b16 %v426
        %v691 = vunpack.c.l.b16 %v427
        %v692 = vunpack.c.l.b16 %v428
        %v693 = vunpack.c.h.b16 %v428
        %v694 = vunpack.c.l.b16 %v429
        %v695 = vunpack.c.l.b16 %v430
        %v696 = vunpack.c.h.b16 %v430
        %v697 = vunpack.c.l.b16 %v431
        %v698 = vunpack.c.l.b16 %v432
        %v699 = vunpack.c.h.b16 %v432
        %v700 = vunpack.c.l.b16 %v433
        %v701 = vunpack.c.l.b16 %v434
        %v702 = vunpack.c.h.b16 %v434
        %v703 = vunpack.c.l.b16 %v435
        %v704 = vunpack.c.l.b16 %v436
        %v705 = vunpack.c.h.b16 %v436
        %v706 = vunpack.c.l.b16 %v437
        %v707 = vunpack.c.l.b16 %v438
        %v708 = vunpack.c.h.b16 %v438
        %v709 = vunpack.c.l.b16 %v439
        %v710 = vunpack.c.l.b16 %v440
        %v711 = vunpack.c.h.b16 %v440
        %v712 = vunpack.c.l.b16 %v441
        %v713 = vunpack.c.l.b16 %v442
        %v714 = vunpack.c.h.b16 %v442
        %v715 = vunpack.c.l.b16 %v443
        %v716 = vunpack.c.l.b16 %v444
        %v717 = vunpack.c.h.b16 %v444
        %v718 = vunpack.c.l.b16 %v445
        %v719 = vunpack.c.l.b16 %v446
        %v720 = vunpack.c.h.b16 %v446
        %v721 = vunpack.c.l.b16 %v447
        %v722 = vunpack.c.l.b16 %v448
        %v723 = vunpack.c.h.b16 %v448
        %v724 = vunpack.c.l.b16 %v449
        %v725 = vunpack.c.l.b16 %v450
        %v726 = vunpack.c.h.b16 %v450
        %v727 = vunpack.c.l.b16 %v451
        %v728 = vunpack.c.l.b16 %v452
        %v729 = vunpack.c.h.b16 %v452
        %v730 = vunpack.c.l.b16 %v453
        %v731 = vunpack.c.l.b16 %v454
        %v732 = vunpack.c.h.b16 %v454
        %v733 = vunpack.c.l.b16 %v455
        %v734 = vunpack.c.l.b16 %v456
        %v735 = vunpack.c.h.b16 %v456
        %v736 = vunpack.c.l.b16 %v457
        %v737 = vunpack.c.l.b16 %v458
        %v738 = vunpack.c.h.b16 %v458
        %v739 = vunpack.c.l.b16 %v459
        %v740 = vunpack.c.l.b16 %v460
        %v741 = vunpack.c.h.b16 %v460
        %v742 = vunpack.c.l.b16 %v461
        %v743 = vunpack.c.l.b16 %v462
        %v744 = vunpack.c.h.b16 %v462
        %v745 = vunpack.c.l.b16 %v463
        %v746 = vunpack.c.l.b16 %v464
        %v747 = vunpack.c.h.b16 %v464
        %v748 = vunpack.c.l.b16 %v465
        %v749 = vunpack.c.l.b16 %v466
        %v750 = vunpack.c.h.b16 %v466
        %v751 = vunpack.c.l.b16 %v467
        %v752 = vunpack.c.l.b16 %v468
        %v753 = vunpack.c.h.b16 %v468
        %v754 = vunpack.c.l.b16 %v469
        %v755 = vunpack.c.l.b16 %v470
        %v756 = vunpack.c.h.b16 %v470
        %v757 = vunpack.c.l.b16 %v471
        %v758 = vunpack.c.l.b16 %v472
        %v759 = vunpack.c.h.b16 %v472
        %v760 = vunpack.c.l.b16 %v473
        %v761 = vunpack.c.l.b16 %v474
        %v762 = vunpack.c.h.b16 %v474
        %v763 = vunpack.c.l.b16 %v475
        %v764 = vunpack.c.l.b16 %v476
        %v765 = vunpack.c.h.b16 %v476
        %v766 = vunpack.c.l.b16 %v477
        %v767 = vunpack.c.l.b16 %v478
        %v768 = vunpack.c.h.b16 %v478
        %v769 = vunpack.c.l.b16 %v479
        %v770 = vunpack.c.l.b16 %v480
        %v771 = vunpack.c.h.b16 %v480
        %v772 = vunpack.c.l.b16 %v481
        %v773 = vunpack.c.l.b16 %v482
        %v774 = vunpack.c.h.b16 %v482
        %v775 = vunpack.c.l.b16 %v483
        %v776 = vunpack.c.l.b16 %v484
        %v777 = vunpack.c.h.b16 %v484
        %v778 = vunpack.c.l.b16 %v485
        %v779 = vunpack.c.l.b16 %v486
        %v780 = vunpack.c.h.b16 %v486
        %v781 = vunpack.c.l.b16 %v487
        %v782 = vunpack.c.l.b16 %v488
        %v783 = vunpack.c.h.b16 %v488
        %v784 = vunpack.c.l.b16 %v489
        %v785 = vunpack.c.l.b16 %v490
        %v786 = vunpack.c.h.b16 %v490
        %v787 = vunpack.c.l.b16 %v491
        %v788 = vpack.c.b16 %v647, %v644
        %v789 = vpack.c.b16 %v648, %v645
        %v790 = vpack.c.b16 %v649, %v646
        %v791 = vpack.c.b16 %v653, %v650
        %v792 = vpack.c.b16 %v654, %v651
        %v793 = vpack.c.b16 %v655, %v652
        %v794 = vpack.c.b16 %v659, %v656
        %v795 = vpack.c.b16 %v660, %v657
        %v796 = vpack.c.b16 %v661, %v658
        %v797 = vpack.c.b16 %v665, %v662
        %v798 = vpack.c.b16 %v666, %v663
        %v799 = vpack.c.b16 %v667, %v664
        %v800 = vpack.c.b16 %v671, %v668
        %v801 = vpack.c.b16 %v672, %v669
        %v802 = vpack.c.b16 %v673, %v670
        %v803 = vpack.c.b16 %v677, %v674
        %v804 = vpack.c.b16 %v678, %v675
        %v805 = vpack.c.b16 %v679, %v676
        %v806 = vpack.c.b16 %v683, %v680
        %v807 = vpack.c.b16 %v684, %v681
        %v808 = vpack.c.b16 %v685, %v682
        %v809 = vpack.c.b16 %v689, %v686
        %v810 = vpack.c.b16 %v690, %v687
        %v811 = vpack.c.b16 %v691, %v688
        %v812 = vpack.c.b16 %v695, %v692
        %v813 = vpack.c.b16 %v696, %v693
        %v814 = vpack.c.b16 %v697, %v694
        %v815 = vpack.c.b16 %v701, %v698
        %v816 = vpack.c.b16 %v702, %v699
        %v817 = vpack.c.b16 %v703, %v700
        %v818 = vpack.c.b16 %v707, %v704
        %v819 = vpack.c.b16 %v708, %v705
        %v820 = vpack.c.b16 %v709, %v706
        %v821 = vpack.c.b16 %v713, %v710
        %v822 = vpack.c.b16 %v714, %v711
        %v823 = vpack.c.b16 %v715, %v712
        %v824 = vpack.c.b16 %v719, %v716
        %v825 = vpack.c.b16 %v720, %v717
        %v826 = vpack.c.b16 %v721, %v718
        %v827 = vpack.c.b16 %v725, %v722
        %v828 = vpack.c.b16 %v726, %v723
        %v829 = vpack.c.b16 %v727, %v724
        %v830 = vpack.c.b16 %v731, %v728
        %v831 = vpack.c.b16 %v732, %v729
        %v832 = vpack.c.b16 %v733, %v730
        %v833 = vpack.c.b16 %v737, %v734
        %v834 = vpack.c.b16 %v738, %v735
        %v835 = vpack.c.b16 %v739, %v736
        %v836 = vpack.c.b16 %v743, %v740
        %v837 = vpack.c.b16 %v744, %v741
        %v838 = vpack.c.b16 %v745, %v742
        %v839 = vpack.c.b16 %v749, %v746
        %v840 = vpack.c.b16 %v750, %v747
        %v841 = vpack.c.b16 %v751, %v748
        %v842 = vpack.c.b16 %v755, %v752
        %v843 = vpack.c.b16 %v756, %v753
        %v844 = vpack.c.b16 %v757, %v754
        %v845 = vpack.c.b16 %v761, %v758
        %v846 = vpack.c.b16 %v762, %v759
        %v847 = vpack.c.b16 %v763, %v760
        %v848 = vpack.c.b16 %v767, %v764
        %v849 = vpack.c.b16 %v768, %v765
        %v850 = vpack.c.b16 %v769, %v766
        %v851 = vpack.c.b16 %v773, %v770
        %v852 = vpack.c.b16 %v774, %v771
        %v853 = vpack.c.b16 %v775, %v772
        %v854 = vpack.c.b16 %v779, %v776
        %v855 = vpack.c.b16 %v780, %v777
        %v856 = vpack.c.b16 %v781, %v778
        %v857 = vpack.c.b16 %v785, %v782
        %v858 = vpack.c.b16 %v786, %v783
        %v859 = vpack.c.b16 %v787, %v784
        %932 = vmatprep.subr.bf16.mxu0 %v810
        %933 = vmatpush1.bf16.msra.mxu0 %v809
        %934 = vmatprep.subr.bf16.mxu0 %v807
        %935 = vmatpush1.bf16.msra.mxu0 %v806
        %936 = vmatprep.subr.bf16.mxu0 %v804
        %937 = vmatpush1.bf16.msra.mxu0 %v803
        %938 = vmatprep.subr.bf16.mxu0 %v801
        %939 = vmatpush1.bf16.msra.mxu0 %v800
        %940 = vmatprep.subr.bf16.mxu0 %v798
        %941 = vmatpush1.bf16.msra.mxu0 %v797
        %942 = vmatprep.subr.bf16.mxu0 %v795
        %943 = vmatpush1.bf16.msra.mxu0 %v794
        %944 = vmatprep.subr.bf16.mxu0 %v792
        %945 = vmatpush1.bf16.msra.mxu0 %v791
        %946 = vmatprep.subr.bf16.mxu0 %v789
        %947 = vmatpush1.bf16.msra.mxu0 %v788
        %948 = vmatprep.subr.bf16.mxu0 %v834
        %949 = vmatpush2.bf16.msra.mxu0 %v833
        %950 = vmatprep.subr.bf16.mxu0 %v831
        %951 = vmatpush2.bf16.msra.mxu0 %v830
        %952 = vmatprep.subr.bf16.mxu0 %v828
        %953 = vmatpush2.bf16.msra.mxu0 %v827
        %954 = vmatprep.subr.bf16.mxu0 %v825
        %955 = vmatpush2.bf16.msra.mxu0 %v824
        %956 = vmatprep.subr.bf16.mxu0 %v822
        %957 = vmatpush2.bf16.msra.mxu0 %v821
        %958 = vmatprep.subr.bf16.mxu0 %v819
        %959 = vmatpush2.bf16.msra.mxu0 %v818
        %960 = vmatprep.subr.bf16.mxu0 %v816
        %961 = vmatpush2.bf16.msra.mxu0 %v815
        %962 = vmatprep.subr.bf16.mxu0 %v813
        %963 = vmatpush2.bf16.msra.mxu0 %v812
        %964 = vmatprep.mubr.bf16.mxu0 %v537
        %965 = vmatmul.mubr.bf16.gmra.mxu0 %v536
        %v966 = vpop.f32.mrf.mxu0
        %v967 = vadd.f32 %v499, %v966
        %v968 = vpop.f32.mrf.mxu0
        %v969 = vadd.f32 %v499, %v968
        %v970 = vpop.f32.mrf.mxu0
        %v971 = vadd.f32 %v504, %v970
        %v972 = vpop.f32.mrf.mxu0
        %v973 = vadd.f32 %v504, %v972
        %974 = vmatprep.mubr.bf16.mxu0 %v540
        %975 = vmatmul.mubr.bf16.gmra.mxu0 %v539
        %v976 = vpop.f32.mrf.mxu0
        %v977 = vadd.f32 %v509, %v976
        %v978 = vpop.f32.mrf.mxu0
        %v979 = vadd.f32 %v509, %v978
        %v980 = vpop.f32.mrf.mxu0
        %v981 = vadd.f32 %v514, %v980
        %v982 = vpop.f32.mrf.mxu0
        %v983 = vadd.f32 %v514, %v982
        %984 = vdwg.mxu0
        %985 = vmatprep.subr.bf16.mxu0 %v858
        %986 = vmatpush1.bf16.msra.mxu0 %v857
        %987 = vmatprep.subr.bf16.mxu0 %v855
        %988 = vmatpush1.bf16.msra.mxu0 %v854
        %989 = vmatprep.subr.bf16.mxu0 %v852
        %990 = vmatpush1.bf16.msra.mxu0 %v851
        %991 = vmatprep.subr.bf16.mxu0 %v849
        %992 = vmatpush1.bf16.msra.mxu0 %v848
        %993 = vmatprep.subr.bf16.mxu0 %v846
        %994 = vmatpush1.bf16.msra.mxu0 %v845
        %995 = vmatprep.subr.bf16.mxu0 %v843
        %996 = vmatpush1.bf16.msra.mxu0 %v842
        %997 = vmatprep.subr.bf16.mxu0 %v840
        %998 = vmatpush1.bf16.msra.mxu0 %v839
        %999 = vmatprep.subr.bf16.mxu0 %v837
        %1000 = vmatpush1.bf16.msra.mxu0 %v836
        %1001 = vmatprep.subr.bf16.mxu0 0
        %1002 = vmatpush2.bf16.msra.mxu0 0
        %1003 = vmatprep.subr.bf16.mxu0 0
        %1004 = vmatpush2.bf16.msra.mxu0 0
        %1005 = vmatprep.subr.bf16.mxu0 0
        %1006 = vmatpush2.bf16.msra.mxu0 0
        %1007 = vmatprep.subr.bf16.mxu0 0
        %1008 = vmatpush2.bf16.msra.mxu0 0
        %1009 = vmatprep.subr.bf16.mxu0 0
        %1010 = vmatpush2.bf16.msra.mxu0 0
        %1011 = vmatprep.subr.bf16.mxu0 0
        %1012 = vmatpush2.bf16.msra.mxu0 0
        %1013 = vmatprep.subr.bf16.mxu0 0
        %1014 = vmatpush2.bf16.msra.mxu0 0
        %1015 = vmatprep.subr.bf16.mxu0 0
        %1016 = vmatpush2.bf16.msra.mxu0 0
        %1017 = vmatprep.mubr.bf16.mxu0 0
        %1018 = vmatmul.mubr.bf16.gmra.mxu0 %v538
        %v1019 = vpop.f32.mrf.mxu0
        %v1020 = vadd.f32 %v967, %v1019
        %v1021 = vpop.f32.mrf.mxu0
        %v1022 = vadd.f32 %v969, %v1021
        %v1023 = vpop.f32.mrf.mxu0
        %v1024 = vadd.f32 %v971, %v1023
        %v1025 = vpop.f32.mrf.mxu0
        %v1026 = vadd.f32 %v973, %v1025
        %1027 = vmatprep.mubr.bf16.mxu0 0
        %1028 = vmatmul.mubr.bf16.gmra.mxu0 %v541
        %v1029 = vpop.f32.mrf.mxu0
        %v1030 = vadd.f32 %v977, %v1029
        %v1031 = vpop.f32.mrf.mxu0
        %v1032 = vadd.f32 %v979, %v1031
        %v1033 = vpop.f32.mrf.mxu0
        %v1034 = vadd.f32 %v981, %v1033
        %v1035 = vpop.f32.mrf.mxu0
        %v1036 = vadd.f32 %v983, %v1035
        %1037 = vdwg.mxu0
        %1038 = vmatprep.subr.bf16.mxu0 0
        %1039 = vmatpush1.bf16.msra.mxu0 %v811
        %1040 = vmatprep.subr.bf16.mxu0 0
        %1041 = vmatpush1.bf16.msra.mxu0 %v808
        %1042 = vmatprep.subr.bf16.mxu0 0
        %1043 = vmatpush1.bf16.msra.mxu0 %v805
        %1044 = vmatprep.subr.bf16.mxu0 0
        %1045 = vmatpush1.bf16.msra.mxu0 %v802
        %1046 = vmatprep.subr.bf16.mxu0 0
        %1047 = vmatpush1.bf16.msra.mxu0 %v799
        %1048 = vmatprep.subr.bf16.mxu0 0
        %1049 = vmatpush1.bf16.msra.mxu0 %v796
        %1050 = vmatprep.subr.bf16.mxu0 0
        %1051 = vmatpush1.bf16.msra.mxu0 %v793
        %1052 = vmatprep.subr.bf16.mxu0 0
        %1053 = vmatpush1.bf16.msra.mxu0 %v790
        %1054 = vmatprep.subr.bf16.mxu0 0
        %1055 = vmatpush2.bf16.msra.mxu0 %v835
        %1056 = vmatprep.subr.bf16.mxu0 0
        %1057 = vmatpush2.bf16.msra.mxu0 %v832
        %1058 = vmatprep.subr.bf16.mxu0 0
        %1059 = vmatpush2.bf16.msra.mxu0 %v829
        %1060 = vmatprep.subr.bf16.mxu0 0
        %1061 = vmatpush2.bf16.msra.mxu0 %v826
        %1062 = vmatprep.subr.bf16.mxu0 0
        %1063 = vmatpush2.bf16.msra.mxu0 %v823
        %1064 = vmatprep.subr.bf16.mxu0 0
        %1065 = vmatpush2.bf16.msra.mxu0 %v820
        %1066 = vmatprep.subr.bf16.mxu0 0
        %1067 = vmatpush2.bf16.msra.mxu0 %v817
        %1068 = vmatprep.subr.bf16.mxu0 0
        %1069 = vmatpush2.bf16.msra.mxu0 %v814
        %1070 = vmatprep.mubr.bf16.mxu0 %v537
        %1071 = vmatmul.mubr.bf16.gmra.mxu0 %v536
        %v1072 = vpop.f32.mrf.mxu0
        %v1073 = vadd.f32 %v499, %v1072
        %v1074 = vpop.f32.mrf.mxu0
        %v1075 = vpop.f32.mrf.mxu0
        %v1076 = vadd.f32 %v504, %v1075
        %v1077 = vpop.f32.mrf.mxu0
        %1078 = vmatprep.mubr.bf16.mxu0 %v540
        %1079 = vmatmul.mubr.bf16.gmra.mxu0 %v539
        %v1080 = vpop.f32.mrf.mxu0
        %v1081 = vadd.f32 %v509, %v1080
        %v1082 = vpop.f32.mrf.mxu0
        %v1083 = vpop.f32.mrf.mxu0
        %v1084 = vadd.f32 %v514, %v1083
        %v1085 = vpop.f32.mrf.mxu0
        %1086 = vdwg.mxu0
        %1087 = vmatprep.subr.bf16.mxu0 0
        %1088 = vmatpush1.bf16.msra.mxu0 %v859
        %1089 = vmatprep.subr.bf16.mxu0 0
        %1090 = vmatpush1.bf16.msra.mxu0 %v856
        %1091 = vmatprep.subr.bf16.mxu0 0
        %1092 = vmatpush1.bf16.msra.mxu0 %v853
        %1093 = vmatprep.subr.bf16.mxu0 0
        %1094 = vmatpush1.bf16.msra.mxu0 %v850
        %1095 = vmatprep.subr.bf16.mxu0 0
        %1096 = vmatpush1.bf16.msra.mxu0 %v847
        %1097 = vmatprep.subr.bf16.mxu0 0
        %1098 = vmatpush1.bf16.msra.mxu0 %v844
        %1099 = vmatprep.subr.bf16.mxu0 0
        %1100 = vmatpush1.bf16.msra.mxu0 %v841
        %1101 = vmatprep.subr.bf16.mxu0 0
        %1102 = vmatpush1.bf16.msra.mxu0 %v838
        %1103 = vmatprep.subr.bf16.mxu0 0
        %1104 = vmatpush2.bf16.msra.mxu0 0
        %1105 = vmatprep.subr.bf16.mxu0 0
        %1106 = vmatpush2.bf16.msra.mxu0 0
        %1107 = vmatprep.subr.bf16.mxu0 0
        %1108 = vmatpush2.bf16.msra.mxu0 0
        %1109 = vmatprep.subr.bf16.mxu0 0
        %1110 = vmatpush2.bf16.msra.mxu0 0
        %1111 = vmatprep.subr.bf16.mxu0 0
        %1112 = vmatpush2.bf16.msra.mxu0 0
        %1113 = vmatprep.subr.bf16.mxu0 0
        %1114 = vmatpush2.bf16.msra.mxu0 0
        %1115 = vmatprep.subr.bf16.mxu0 0
        %1116 = vmatpush2.bf16.msra.mxu0 0
        %1117 = vmatprep.subr.bf16.mxu0 0
        %1118 = vmatpush2.bf16.msra.mxu0 0
        %1119 = vmatprep.mubr.bf16.mxu0 0
        %1120 = vmatmul.mubr.bf16.gmra.mxu0 %v538
        %v1121 = vpop.f32.mrf.mxu0
        %v1122 = vadd.f32 %v1073, %v1121
        %v1123 = vpop.f32.mrf.mxu0
        %v1124 = vpop.f32.mrf.mxu0
        %v1125 = vadd.f32 %v1076, %v1124
        %v1126 = vpop.f32.mrf.mxu0
        %1127 = vmatprep.mubr.bf16.mxu0 0
        %1128 = vmatmul.mubr.bf16.gmra.mxu0 %v541
        %v1129 = vpop.f32.mrf.mxu0
        %v1130 = vadd.f32 %v1081, %v1129
        %v1131 = vpop.f32.mrf.mxu0
        %v1132 = vpop.f32.mrf.mxu0
        %v1133 = vadd.f32 %v1084, %v1132
        %v1134 = vpop.f32.mrf.mxu0
        %1135 = vdwg.mxu0
        %v1136 = vmax.f32 %v1020, 0.0
        %v1137 = vmax.f32 %v1022, 0.0
        %v1138 = vmax.f32 %v1122, 0.0
        %v1139 = vmax.f32 %v1024, 0.0
        %v1140 = vmax.f32 %v1026, 0.0
        %v1141 = vmax.f32 %v1125, 0.0
        %v1142 = vmax.f32 %v1030, 0.0
        %v1143 = vmax.f32 %v1032, 0.0
        %v1144 = vmax.f32 %v1130, 0.0
        %v1145 = vmax.f32 %v1034, 0.0
        %v1146 = vmax.f32 %v1036, 0.0
        %v1147 = vmax.f32 %v1133, 0.0
        %v1148 = vpack.c.bf16 %v1139, %v1136
        %v1149 = vpack.c.bf16 %v1140, %v1137
        %v1150 = vpack.c.bf16 %v1141, %v1138
        %v1151 = vpack.c.bf16 %v1145, %v1142
        %v1152 = vpack.c.bf16 %v1146, %v1143
        %v1153 = vpack.c.bf16 %v1147, %v1144
        %v1160 = vunpack.c.l.b16 %v1148
        %v1161 = vunpack.c.l.b16 %v1149
        %v1162 = vunpack.c.l.b16 %v1150
        %v1163 = vunpack.c.h.b16 %v1148
        %v1164 = vunpack.c.h.b16 %v1149
        %v1165 = vunpack.c.h.b16 %v1150
        %v1166 = vunpack.c.l.b16 %v1151
        %v1167 = vunpack.c.l.b16 %v1152
        %v1168 = vunpack.c.l.b16 %v1153
        %v1169 = vunpack.c.h.b16 %v1151
        %v1170 = vunpack.c.h.b16 %v1152
        %v1171 = vunpack.c.h.b16 %v1153
        %v1172 = vpack.c.b16 %v1161, %v1160
        %v1173 = vpack.c.b16 %v1162, %v1162
        %v1174 = vpack.c.b16 %v1164, %v1163
        %v1175 = vpack.c.b16 %v1165, %v1165
        %v1176 = vpack.c.b16 %v1167, %v1166
        %v1177 = vpack.c.b16 %v1168, %v1168
        %v1178 = vpack.c.b16 %v1170, %v1169
        %v1179 = vpack.c.b16 %v1171, %v1171
        %1188 = vst [vmem:[%s384] sm:$0xff] %v1172
        %1189 = vst [vmem:[%s384 + $0x8] sm:$0xf] %v1173
        %1190 = vst [vmem:[%s384 + $0xc] sm:$0xff] %v1174
        %1191 = vst [vmem:[%s384 + $0x14] sm:$0xf] %v1175
        %1192 = vst [vmem:[%s384 + $0x18] sm:$0xff] %v1176
        %1193 = vst [vmem:[%s384 + $0x20] sm:$0xf] %v1177
        %1194 = vst [vmem:[%s384 + $0x24] sm:$0xff] %v1178
        %1195 = vst [vmem:[%s384 + $0x2c] sm:$0xf] %v1179
        %s1196 = sand.u32 %s90, 1
        %s1197 = sand.u32 %s90, 1
        %s1198 = smul.addr %s1197, 48
        %s1199 = scalar_lea.vmem [#allocation3], %s1198
        // Predicated region
        $region59: #{forward.3} parent=53 // pred_check
          %p1200 = pneg %p100
        $region60: #{forward.3} parent=53 // pred_check_branch
          %1202 = sbr.rel (%p1200) target = $region62
        $region61: #{forward.3} parent=53 // pred_region
          %s1203 = smul.u32 3, %s14
          %s1204 = smul.addr %s1203, 4
          %s1205 = scalar_lea.vmem %s3, %s1204
          // Predicated region
          $region63: #{forward.3} parent=61 // pred_check
            _
          $region64: #{forward.3} parent=61 // pred_check_branch
            %1207 = sbr.rel (0) target = $region66
          $region65: #{forward.3} parent=61 // pred_region
            // Predicated region
            $region67: #{forward.3} parent=65 // pred_check
              _
            $region68: #{forward.3} parent=65 // pred_check_branch
              %1209 = sbr.rel (0) target = $region70
            $region69: #{forward.3} parent=65 // pred_region
              %s1210 = scalar_lea.vmem %s1199, 8 [#allocation3]
              %s1211 = scalar_lea.vmem %s1205, 8
              loop: start=0, step=1, limit=1
              $region71: #{forward.3} parent=69 // loop_pre_header
                _
              $region72: #{forward.3} parent=69 // loop_header
                %s1213 = sphi 0, %s1217
                %p1214 = scmp.ge.s32.totalorder %s1213, 1
                %s1218 = sphi %s1199, %s1199
                %s1219 = sphi %s1205, %s1205
              $region73: #{forward.3} parent=69 // loop_header_branch
                %1216 = sbr.rel (%p1214) target = $region77
              $region74: #{forward.3} parent=69 // loop_body
                %v1220 = vld [vmem:[%s1218] sm:$0xff]
                %1221 = vst [vmem:[%s1219] sm:$0xff] %v1220
                %v1222 = vld [vmem:[%s1218 + $0xc] sm:$0xff]
                %1223 = vst [vmem:[%s1219 + $0x18] sm:$0xff] %v1222
                %v1224 = vld [vmem:[%s1218 + $0x18] sm:$0xff]
                %1225 = vst [vmem:[%s1219 + $0x30] sm:$0xff] %v1224
                %v1226 = vld [vmem:[%s1218 + $0x24] sm:$0xff]
                %1227 = vst [vmem:[%s1219 + $0x48] sm:$0xff] %v1226
              $region75: #{forward.3} parent=69 // loop_footer
                %s1217 = sadd.s32 1, %s1213
              $region76: #{forward.3} parent=69 // loop_footer_branch
                %1212 = sbr.rel target = $region72
              $region77: #{forward.3} parent=69 // loop_exit
                _
              %s1229 = ssub.s32 16, 1
              loop: start=0, step=1, limit=1
              $region78: #{forward.3} parent=69 // loop_pre_header
                _
              $region79: #{forward.3} parent=69 // loop_header
                %s1231 = sphi 0, %s1235
                %p1232 = scmp.ge.s32.totalorder %s1231, 1
                %s1236 = sphi %s1210, %s1210
                %s1237 = sphi %s1211, %s1211
              $region80: #{forward.3} parent=69 // loop_header_branch
                %1234 = sbr.rel (%p1232) target = $region84
              $region81: #{forward.3} parent=69 // loop_body
                %v1238 = vld [vmem:[%s1236] sm:%s1229]
                %1239 = vst [vmem:[%s1237] sm:%s1229] %v1238
                %v1240 = vld [vmem:[%s1236 + $0xc] sm:%s1229]
                %1241 = vst [vmem:[%s1237 + $0x18] sm:%s1229] %v1240
                %v1242 = vld [vmem:[%s1236 + $0x18] sm:%s1229]
                %1243 = vst [vmem:[%s1237 + $0x30] sm:%s1229] %v1242
                %v1244 = vld [vmem:[%s1236 + $0x24] sm:%s1229]
                %1245 = vst [vmem:[%s1237 + $0x48] sm:%s1229] %v1244
              $region82: #{forward.3} parent=69 // loop_footer
                %s1235 = sadd.s32 1, %s1231
              $region83: #{forward.3} parent=69 // loop_footer_branch
                %1230 = sbr.rel target = $region79
              $region84: #{forward.3} parent=69 // loop_exit
                _
            $region70: #{forward.3} parent=65 // pred_fallthru
              _
          $region66: #{forward.3} parent=61 // pred_fallthru
            _
          %1246 = vnop
        $region62: #{forward.3} parent=53 // pred_fallthru
          _
      $region54: #{forward.3} parent=5 // pred_fallthru
        _
      %p1247 = scmp.le.s32.totalorder 2, %s9
      // Predicated region
      $region85: #{forward.3} parent=5 // pred_check
        %p1248 = pneg %p1247
      $region86: #{forward.3} parent=5 // pred_check_branch
        %1250 = sbr.rel (%p1248) target = $region88
      $region87: #{forward.3} parent=5 // pred_region
        %s1251 = ssub.s32 %s9, 2
        // Predicated region
        $region89: #{forward.3} parent=87 // pred_check
          %p1252 = pneg %p106
        $region90: #{forward.3} parent=87 // pred_check_branch
          %1254 = sbr.rel (%p1252) target = $region92
        $region91: #{forward.3} parent=87 // pred_region
          %s1255 = sand.u32 %s91, 1
          %s1256 = sand.u32 %s91, 1
          %s1257 = smul.addr %s1256, 48
          %s1258 = scalar_lea.vmem [#allocation3], %s1257
        $region92: #{forward.3} parent=87 // pred_fallthru
          _
      $region88: #{forward.3} parent=5 // pred_fallthru
        _
    $region6: #{forward.3} parent=1 // loop_footer
      %s13 = sadd.s32 1, %s9
    $region7: #{forward.3} parent=1 // loop_footer_branch
      %8 = sbr.rel target = $region3
    $region8: #{forward.3} parent=1 // loop_exit
      _

// kernel: forward.4
$region0: #{forward.4}
  #allocation0 [shape = 'u32[]', space=smem, size = 0x4, offset = 0x4, fixed_abs, tag = 'smem constant byte address 0x4 - core index']
  #allocation1 [shape = 'u32[144,128]{1,0:T(1,128)}', space=vmem, size = 0x12000, scoped, tag = 'internal scratch']
  %s0 = inlined_call_operand.vmem [shape: bf16[64,896], index: 0, kind: input, shape index: {}]
  %s1 = inlined_call_operand.vmem [shape: bf16[896,128], index: 1, kind: input, shape index: {}]
  %s2 = inlined_call_operand.vmem [shape: f32[64,1], index: 2, kind: input, shape index: {}]
  %s3 = inlined_call_operand.vmem [shape: bf16[64,128], index: 3, kind: output, shape index: {}]
  %s4 = sld [smem:[#allocation0]]
  $region22: #{forward.4} parent=0
    _
  %s6 = ssub.s32 1, %s4
  %s7 = scalar_select 0, %s6, %s4
  // Predicated region
  $region2: #{forward.4} parent=0 // pred_check
    _
  $region3: #{forward.4} parent=0 // pred_check_branch
    %9 = sbr.rel (0) target = $region5
  $region4: #{forward.4} parent=0 // pred_region
    _
  $region5: #{forward.4} parent=0 // pred_fallthru
    _
  // Predicated region
  $region6: #{forward.4} parent=0 // pred_check
    _
  $region7: #{forward.4} parent=0 // pred_check_branch
    %11 = sbr.rel (0) target = $region9
  $region8: #{forward.4} parent=0 // pred_region
    _
  $region9: #{forward.4} parent=0 // pred_fallthru
    _
  // Predicated region
  $region10: #{forward.4} parent=0 // pred_check
    _
  $region11: #{forward.4} parent=0 // pred_check_branch
    %13 = sbr.rel (0) target = $region13
  $region12: #{forward.4} parent=0 // pred_region
    _
  $region13: #{forward.4} parent=0 // pred_fallthru
    _
  %v15 = vld [vmem:[%s0] sm:$0xff]
  %v16 = vld [vmem:[%s0 + $0x8] sm:$0xff]
  %v17 = vld [vmem:[%s0 + $0x10] sm:$0xff]
  %v18 = vld [vmem:[%s0 + $0x18] sm:$0xf]
  %v19 = vld [vmem:[%s0 + $0x1c] sm:$0xff]
  %v20 = vld [vmem:[%s0 + $0x24] sm:$0xff]
  %v21 = vld [vmem:[%s0 + $0x2c] sm:$0xff]
  %v22 = vld [vmem:[%s0 + $0x34] sm:$0xf]
  %v23 = vld [vmem:[%s0 + $0x38] sm:$0xff]
  %v24 = vld [vmem:[%s0 + $0x40] sm:$0xff]
  %v25 = vld [vmem:[%s0 + $0x48] sm:$0xff]
  %v26 = vld [vmem:[%s0 + $0x50] sm:$0xf]
  %v27 = vld [vmem:[%s0 + $0x54] sm:$0xff]
  %v28 = vld [vmem:[%s0 + $0x5c] sm:$0xff]
  %v29 = vld [vmem:[%s0 + $0x64] sm:$0xff]
  %v30 = vld [vmem:[%s0 + $0x6c] sm:$0xf]
  %v31 = vld [vmem:[%s0 + $0x70] sm:$0xff]
  %v32 = vld [vmem:[%s0 + $0x78] sm:$0xff]
  %v33 = vld [vmem:[%s0 + $0x80] sm:$0xff]
  %v34 = vld [vmem:[%s0 + $0x88] sm:$0xf]
  %v35 = vld [vmem:[%s0 + $0x8c] sm:$0xff]
  %v36 = vld [vmem:[%s0 + $0x94] sm:$0xff]
  %v37 = vld [vmem:[%s0 + $0x9c] sm:$0xff]
  %v38 = vld [vmem:[%s0 + $0xa4] sm:$0xf]
  %v39 = vld [vmem:[%s0 + $0xa8] sm:$0xff]
  %v40 = vld [vmem:[%s0 + $0xb0] sm:$0xff]
  %v41 = vld [vmem:[%s0 + $0xb8] sm:$0xff]
  %v42 = vld [vmem:[%s0 + $0xc0] sm:$0xf]
  %v43 = vld [vmem:[%s0 + $0xc4] sm:$0xff]
  %v44 = vld [vmem:[%s0 + $0xcc] sm:$0xff]
  %v45 = vld [vmem:[%s0 + $0xd4] sm:$0xff]
  %v46 = vld [vmem:[%s0 + $0xdc] sm:$0xf]
  %v47 = vld [vmem:[%s1] sm:$0xf]
  %v48 = vld [vmem:[%s1 + $0x4] sm:$0xf]
  %v49 = vld [vmem:[%s1 + $0x8] sm:$0xf]
  %v50 = vld [vmem:[%s1 + $0xc] sm:$0xf]
  %v51 = vld [vmem:[%s1 + $0x10] sm:$0xf]
  %v52 = vld [vmem:[%s1 + $0x14] sm:$0xf]
  %v53 = vld [vmem:[%s1 + $0x18] sm:$0xf]
  %v54 = vld [vmem:[%s1 + $0x1c] sm:$0xf]
  %v55 = vld [vmem:[%s1 + $0x20] sm:$0xf]
  %v56 = vld [vmem:[%s1 + $0x24] sm:$0xf]
  %v57 = vld [vmem:[%s1 + $0x28] sm:$0xf]
  %v58 = vld [vmem:[%s1 + $0x2c] sm:$0xf]
  %v59 = vld [vmem:[%s1 + $0x30] sm:$0xf]
  %v60 = vld [vmem:[%s1 + $0x34] sm:$0xf]
  %v61 = vld [vmem:[%s1 + $0x38] sm:$0xf]
  %v62 = vld [vmem:[%s1 + $0x3c] sm:$0xf]
  %v63 = vld [vmem:[%s1 + $0x40] sm:$0xf]
  %v64 = vld [vmem:[%s1 + $0x44] sm:$0xf]
  %v65 = vld [vmem:[%s1 + $0x48] sm:$0xf]
  %v66 = vld [vmem:[%s1 + $0x4c] sm:$0xf]
  %v67 = vld [vmem:[%s1 + $0x50] sm:$0xf]
  %v68 = vld [vmem:[%s1 + $0x54] sm:$0xf]
  %v69 = vld [vmem:[%s1 + $0x58] sm:$0xf]
  %v70 = vld [vmem:[%s1 + $0x5c] sm:$0xf]
  %v71 = vld [vmem:[%s1 + $0x60] sm:$0xf]
  %v72 = vld [vmem:[%s1 + $0x64] sm:$0xf]
  %v73 = vld [vmem:[%s1 + $0x68] sm:$0xf]
  %v74 = vld [vmem:[%s1 + $0x6c] sm:$0xf]
  %v75 = vld [vmem:[%s1 + $0x70] sm:$0xf]
  %v76 = vld [vmem:[%s1 + $0x74] sm:$0xf]
  %v77 = vld [vmem:[%s1 + $0x78] sm:$0xf]
  %v78 = vld [vmem:[%s1 + $0x7c] sm:$0xf]
  %v79 = vld [vmem:[%s1 + $0x80] sm:$0xf]
  %v80 = vld [vmem:[%s1 + $0x84] sm:$0xf]
  %v81 = vld [vmem:[%s1 + $0x88] sm:$0xf]
  %v82 = vld [vmem:[%s1 + $0x8c] sm:$0xf]
  %v83 = vld [vmem:[%s1 + $0x90] sm:$0xf]
  %v84 = vld [vmem:[%s1 + $0x94] sm:$0xf]
  %v85 = vld [vmem:[%s1 + $0x98] sm:$0xf]
  %v86 = vld [vmem:[%s1 + $0x9c] sm:$0xf]
  %v87 = vld [vmem:[%s1 + $0xa0] sm:$0xf]
  %v88 = vld [vmem:[%s1 + $0xa4] sm:$0xf]
  %v89 = vld [vmem:[%s1 + $0xa8] sm:$0xf]
  %v90 = vld [vmem:[%s1 + $0xac] sm:$0xf]
  %v91 = vld [vmem:[%s1 + $0xb0] sm:$0xf]
  %v92 = vld [vmem:[%s1 + $0xb4] sm:$0xf]
  %v93 = vld [vmem:[%s1 + $0xb8] sm:$0xf]
  %v94 = vld [vmem:[%s1 + $0xbc] sm:$0xf]
  %v95 = vld [vmem:[%s1 + $0xc0] sm:$0xf]
  %v96 = vld [vmem:[%s1 + $0xc4] sm:$0xf]
  %v97 = vld [vmem:[%s1 + $0xc8] sm:$0xf]
  %v98 = vld [vmem:[%s1 + $0xcc] sm:$0xf]
  %v99 = vld [vmem:[%s1 + $0xd0] sm:$0xf]
  %v100 = vld [vmem:[%s1 + $0xd4] sm:$0xf]
  %v101 = vld [vmem:[%s1 + $0xd8] sm:$0xf]
  %v102 = vld [vmem:[%s1 + $0xdc] sm:$0xf]
  %v103 = vld [vmem:[%s1 + $0xe0] sm:$0xf]
  %v104 = vld [vmem:[%s1 + $0xe4] sm:$0xf]
  %v105 = vld [vmem:[%s1 + $0xe8] sm:$0xf]
  %v106 = vld [vmem:[%s1 + $0xec] sm:$0xf]
  %v107 = vld [vmem:[%s1 + $0xf0] sm:$0xf]
  %v108 = vld [vmem:[%s1 + $0xf4] sm:$0xf]
  %v109 = vld [vmem:[%s1 + $0xf8] sm:$0xf]
  %v110 = vld [vmem:[%s1 + $0xfc] sm:$0xf]
  %v111 = vld [vmem:[%s1 + $0x100] sm:$0xf]
  %v112 = vld [vmem:[%s1 + $0x104] sm:$0xf]
  %v113 = vld [vmem:[%s1 + $0x108] sm:$0xf]
  %v114 = vld [vmem:[%s1 + $0x10c] sm:$0xf]
  %v115 = vld [vmem:[%s1 + $0x110] sm:$0xf]
  %v116 = vld [vmem:[%s1 + $0x114] sm:$0xf]
  %v117 = vld [vmem:[%s1 + $0x118] sm:$0xf]
  %v118 = vld [vmem:[%s1 + $0x11c] sm:$0xf]
  %v119 = vld [vmem:[%s1 + $0x120] sm:$0xf]
  %v120 = vld [vmem:[%s1 + $0x124] sm:$0xf]
  %v121 = vld [vmem:[%s1 + $0x128] sm:$0xf]
  %v122 = vld [vmem:[%s1 + $0x12c] sm:$0xf]
  %v123 = vld [vmem:[%s1 + $0x130] sm:$0xf]
  %v124 = vld [vmem:[%s1 + $0x134] sm:$0xf]
  %v125 = vld [vmem:[%s1 + $0x138] sm:$0xf]
  %v126 = vld [vmem:[%s1 + $0x13c] sm:$0xf]
  %v127 = vld [vmem:[%s1 + $0x140] sm:$0xf]
  %v128 = vld [vmem:[%s1 + $0x144] sm:$0xf]
  %v129 = vld [vmem:[%s1 + $0x148] sm:$0xf]
  %v130 = vld [vmem:[%s1 + $0x14c] sm:$0xf]
  %v131 = vld [vmem:[%s1 + $0x150] sm:$0xf]
  %v132 = vld [vmem:[%s1 + $0x154] sm:$0xf]
  %v133 = vld [vmem:[%s1 + $0x158] sm:$0xf]
  %v134 = vld [vmem:[%s1 + $0x15c] sm:$0xf]
  %v135 = vld [vmem:[%s1 + $0x160] sm:$0xf]
  %v136 = vld [vmem:[%s1 + $0x164] sm:$0xf]
  %v137 = vld [vmem:[%s1 + $0x168] sm:$0xf]
  %v138 = vld [vmem:[%s1 + $0x16c] sm:$0xf]
  %v139 = vld [vmem:[%s1 + $0x170] sm:$0xf]
  %v140 = vld [vmem:[%s1 + $0x174] sm:$0xf]
  %v141 = vld [vmem:[%s1 + $0x178] sm:$0xf]
  %v142 = vld [vmem:[%s1 + $0x17c] sm:$0xf]
  %v143 = vld [vmem:[%s1 + $0x180] sm:$0xf]
  %v144 = vld [vmem:[%s1 + $0x184] sm:$0xf]
  %v145 = vld [vmem:[%s1 + $0x188] sm:$0xf]
  %v146 = vld [vmem:[%s1 + $0x18c] sm:$0xf]
  %v147 = vld [vmem:[%s1 + $0x190] sm:$0xf]
  %v148 = vld [vmem:[%s1 + $0x194] sm:$0xf]
  %v149 = vld [vmem:[%s1 + $0x198] sm:$0xf]
  %v150 = vld [vmem:[%s1 + $0x19c] sm:$0xf]
  %v151 = vld [vmem:[%s1 + $0x1a0] sm:$0xf]
  %v152 = vld [vmem:[%s1 + $0x1a4] sm:$0xf]
  %v153 = vld [vmem:[%s1 + $0x1a8] sm:$0xf]
  %v154 = vld [vmem:[%s1 + $0x1ac] sm:$0xf]
  %v155 = vld [vmem:[%s1 + $0x1b0] sm:$0xf]
  %v156 = vld [vmem:[%s1 + $0x1b4] sm:$0xf]
  %v157 = vld [vmem:[%s1 + $0x1b8] sm:$0xf]
  %v158 = vld [vmem:[%s1 + $0x1bc] sm:$0xf]
  %v159 = vld [vmem:[%s2] sm:$0xff]
  %v160 = vld [vmem:[%s2 + $0x8] sm:$0xff]
  %v161 = vld [vmem:[%s2 + $0x10] sm:$0xff]
  %v162 = vld [vmem:[%s2 + $0x18] sm:$0xff]
  %v163 = vld [vmem:[%s2 + $0x20] sm:$0xff]
  %v164 = vld [vmem:[%s2 + $0x28] sm:$0xff]
  %v165 = vld [vmem:[%s2 + $0x30] sm:$0xff]
  %v166 = vld [vmem:[%s2 + $0x38] sm:$0xff]
  %168 = vset.pattern.permute.xlu0 0
  %169 = vperm.xlu0 %168, %v159
  %v170 = vpop.permute.xlu0 %169
  %173 = vset.pattern.permute.xlu0 0
  %174 = vperm.xlu0 %173, %v160
  %v175 = vpop.permute.xlu0 %174
  %178 = vset.pattern.permute.xlu0 0
  %179 = vperm.xlu0 %178, %v161
  %v180 = vpop.permute.xlu0 %179
  %183 = vset.pattern.permute.xlu0 0
  %184 = vperm.xlu0 %183, %v162
  %v185 = vpop.permute.xlu0 %184
  %188 = vset.pattern.permute.xlu0 0
  %189 = vperm.xlu0 %188, %v163
  %v190 = vpop.permute.xlu0 %189
  %193 = vset.pattern.permute.xlu0 0
  %194 = vperm.xlu0 %193, %v164
  %v195 = vpop.permute.xlu0 %194
  %198 = vset.pattern.permute.xlu0 0
  %199 = vperm.xlu0 %198, %v165
  %v200 = vpop.permute.xlu0 %199
  %203 = vset.pattern.permute.xlu0 0
  %204 = vperm.xlu0 %203, %v166
  %v205 = vpop.permute.xlu0 %204
  %v239 = vunpack.c.l.b16 %v15
  %v240 = vunpack.c.h.b16 %v15
  %v241 = vunpack.c.l.b16 %v16
  %v242 = vunpack.c.h.b16 %v16
  %v243 = vunpack.c.l.b16 %v17
  %v244 = vunpack.c.h.b16 %v17
  %v245 = vunpack.c.l.b16 %v18
  %v246 = vunpack.c.l.b16 %v19
  %v247 = vunpack.c.h.b16 %v19
  %v248 = vunpack.c.l.b16 %v20
  %v249 = vunpack.c.h.b16 %v20
  %v250 = vunpack.c.l.b16 %v21
  %v251 = vunpack.c.h.b16 %v21
  %v252 = vunpack.c.l.b16 %v22
  %v253 = vunpack.c.l.b16 %v23
  %v254 = vunpack.c.h.b16 %v23
  %v255 = vunpack.c.l.b16 %v24
  %v256 = vunpack.c.h.b16 %v24
  %v257 = vunpack.c.l.b16 %v25
  %v258 = vunpack.c.h.b16 %v25
  %v259 = vunpack.c.l.b16 %v26
  %v260 = vunpack.c.l.b16 %v27
  %v261 = vunpack.c.h.b16 %v27
  %v262 = vunpack.c.l.b16 %v28
  %v263 = vunpack.c.h.b16 %v28
  %v264 = vunpack.c.l.b16 %v29
  %v265 = vunpack.c.h.b16 %v29
  %v266 = vunpack.c.l.b16 %v30
  %v267 = vunpack.c.l.b16 %v31
  %v268 = vunpack.c.h.b16 %v31
  %v269 = vunpack.c.l.b16 %v32
  %v270 = vunpack.c.h.b16 %v32
  %v271 = vunpack.c.l.b16 %v33
  %v272 = vunpack.c.h.b16 %v33
  %v273 = vunpack.c.l.b16 %v34
  %v274 = vunpack.c.l.b16 %v35
  %v275 = vunpack.c.h.b16 %v35
  %v276 = vunpack.c.l.b16 %v36
  %v277 = vunpack.c.h.b16 %v36
  %v278 = vunpack.c.l.b16 %v37
  %v279 = vunpack.c.h.b16 %v37
  %v280 = vunpack.c.l.b16 %v38
  %v281 = vunpack.c.l.b16 %v39
  %v282 = vunpack.c.h.b16 %v39
  %v283 = vunpack.c.l.b16 %v40
  %v284 = vunpack.c.h.b16 %v40
  %v285 = vunpack.c.l.b16 %v41
  %v286 = vunpack.c.h.b16 %v41
  %v287 = vunpack.c.l.b16 %v42
  %v288 = vunpack.c.l.b16 %v43
  %v289 = vunpack.c.h.b16 %v43
  %v290 = vunpack.c.l.b16 %v44
  %v291 = vunpack.c.h.b16 %v44
  %v292 = vunpack.c.l.b16 %v45
  %v293 = vunpack.c.h.b16 %v45
  %v294 = vunpack.c.l.b16 %v46
  %v295 = vpack.c.b16 %v246, %v239
  %v296 = vpack.c.b16 %v247, %v240
  %v297 = vpack.c.b16 %v248, %v241
  %v298 = vpack.c.b16 %v249, %v242
  %v299 = vpack.c.b16 %v250, %v243
  %v300 = vpack.c.b16 %v251, %v244
  %v301 = vpack.c.b16 %v252, %v245
  %v302 = vpack.c.b16 %v260, %v253
  %v303 = vpack.c.b16 %v261, %v254
  %v304 = vpack.c.b16 %v262, %v255
  %v305 = vpack.c.b16 %v263, %v256
  %v306 = vpack.c.b16 %v264, %v257
  %v307 = vpack.c.b16 %v265, %v258
  %v308 = vpack.c.b16 %v266, %v259
  %v309 = vpack.c.b16 %v274, %v267
  %v310 = vpack.c.b16 %v275, %v268
  %v311 = vpack.c.b16 %v276, %v269
  %v312 = vpack.c.b16 %v277, %v270
  %v313 = vpack.c.b16 %v278, %v271
  %v314 = vpack.c.b16 %v279, %v272
  %v315 = vpack.c.b16 %v280, %v273
  %v316 = vpack.c.b16 %v288, %v281
  %v317 = vpack.c.b16 %v289, %v282
  %v318 = vpack.c.b16 %v290, %v283
  %v319 = vpack.c.b16 %v291, %v284
  %v320 = vpack.c.b16 %v292, %v285
  %v321 = vpack.c.b16 %v293, %v286
  %v322 = vpack.c.b16 %v294, %v287
  %v463 = vunpack.c.l.b16 %v47
  %v464 = vunpack.c.l.b16 %v48
  %v465 = vunpack.c.l.b16 %v49
  %v466 = vunpack.c.l.b16 %v50
  %v467 = vunpack.c.l.b16 %v51
  %v468 = vunpack.c.l.b16 %v52
  %v469 = vunpack.c.l.b16 %v53
  %v470 = vunpack.c.l.b16 %v54
  %v471 = vunpack.c.l.b16 %v55
  %v472 = vunpack.c.l.b16 %v56
  %v473 = vunpack.c.l.b16 %v57
  %v474 = vunpack.c.l.b16 %v58
  %v475 = vunpack.c.l.b16 %v59
  %v476 = vunpack.c.l.b16 %v60
  %v477 = vunpack.c.l.b16 %v61
  %v478 = vunpack.c.l.b16 %v62
  %v479 = vunpack.c.l.b16 %v63
  %v480 = vunpack.c.l.b16 %v64
  %v481 = vunpack.c.l.b16 %v65
  %v482 = vunpack.c.l.b16 %v66
  %v483 = vunpack.c.l.b16 %v67
  %v484 = vunpack.c.l.b16 %v68
  %v485 = vunpack.c.l.b16 %v69
  %v486 = vunpack.c.l.b16 %v70
  %v487 = vunpack.c.l.b16 %v71
  %v488 = vunpack.c.l.b16 %v72
  %v489 = vunpack.c.l.b16 %v73
  %v490 = vunpack.c.l.b16 %v74
  %v491 = vunpack.c.l.b16 %v75
  %v492 = vunpack.c.l.b16 %v76
  %v493 = vunpack.c.l.b16 %v77
  %v494 = vunpack.c.l.b16 %v78
  %v495 = vunpack.c.l.b16 %v79
  %v496 = vunpack.c.l.b16 %v80
  %v497 = vunpack.c.l.b16 %v81
  %v498 = vunpack.c.l.b16 %v82
  %v499 = vunpack.c.l.b16 %v83
  %v500 = vunpack.c.l.b16 %v84
  %v501 = vunpack.c.l.b16 %v85
  %v502 = vunpack.c.l.b16 %v86
  %v503 = vunpack.c.l.b16 %v87
  %v504 = vunpack.c.l.b16 %v88
  %v505 = vunpack.c.l.b16 %v89
  %v506 = vunpack.c.l.b16 %v90
  %v507 = vunpack.c.l.b16 %v91
  %v508 = vunpack.c.l.b16 %v92
  %v509 = vunpack.c.l.b16 %v93
  %v510 = vunpack.c.l.b16 %v94
  %v511 = vunpack.c.l.b16 %v95
  %v512 = vunpack.c.l.b16 %v96
  %v513 = vunpack.c.l.b16 %v97
  %v514 = vunpack.c.l.b16 %v98
  %v515 = vunpack.c.l.b16 %v99
  %v516 = vunpack.c.l.b16 %v100
  %v517 = vunpack.c.l.b16 %v101
  %v518 = vunpack.c.l.b16 %v102
  %v519 = vunpack.c.l.b16 %v103
  %v520 = vunpack.c.l.b16 %v104
  %v521 = vunpack.c.l.b16 %v105
  %v522 = vunpack.c.l.b16 %v106
  %v523 = vunpack.c.l.b16 %v107
  %v524 = vunpack.c.l.b16 %v108
  %v525 = vunpack.c.l.b16 %v109
  %v526 = vunpack.c.l.b16 %v110
  %v527 = vunpack.c.l.b16 %v111
  %v528 = vunpack.c.l.b16 %v112
  %v529 = vunpack.c.l.b16 %v113
  %v530 = vunpack.c.l.b16 %v114
  %v531 = vunpack.c.l.b16 %v115
  %v532 = vunpack.c.l.b16 %v116
  %v533 = vunpack.c.l.b16 %v117
  %v534 = vunpack.c.l.b16 %v118
  %v535 = vunpack.c.l.b16 %v119
  %v536 = vunpack.c.l.b16 %v120
  %v537 = vunpack.c.l.b16 %v121
  %v538 = vunpack.c.l.b16 %v122
  %v539 = vunpack.c.l.b16 %v123
  %v540 = vunpack.c.l.b16 %v124
  %v541 = vunpack.c.l.b16 %v125
  %v542 = vunpack.c.l.b16 %v126
  %v543 = vunpack.c.l.b16 %v127
  %v544 = vunpack.c.l.b16 %v128
  %v545 = vunpack.c.l.b16 %v129
  %v546 = vunpack.c.l.b16 %v130
  %v547 = vunpack.c.l.b16 %v131
  %v548 = vunpack.c.l.b16 %v132
  %v549 = vunpack.c.l.b16 %v133
  %v550 = vunpack.c.l.b16 %v134
  %v551 = vunpack.c.l.b16 %v135
  %v552 = vunpack.c.l.b16 %v136
  %v553 = vunpack.c.l.b16 %v137
  %v554 = vunpack.c.l.b16 %v138
  %v555 = vunpack.c.l.b16 %v139
  %v556 = vunpack.c.l.b16 %v140
  %v557 = vunpack.c.l.b16 %v141
  %v558 = vunpack.c.l.b16 %v142
  %v559 = vunpack.c.l.b16 %v143
  %v560 = vunpack.c.l.b16 %v144
  %v561 = vunpack.c.l.b16 %v145
  %v562 = vunpack.c.l.b16 %v146
  %v563 = vunpack.c.l.b16 %v147
  %v564 = vunpack.c.l.b16 %v148
  %v565 = vunpack.c.l.b16 %v149
  %v566 = vunpack.c.l.b16 %v150
  %v567 = vunpack.c.l.b16 %v151
  %v568 = vunpack.c.l.b16 %v152
  %v569 = vunpack.c.l.b16 %v153
  %v570 = vunpack.c.l.b16 %v154
  %v571 = vunpack.c.l.b16 %v155
  %v572 = vunpack.c.l.b16 %v156
  %v573 = vunpack.c.l.b16 %v157
  %v574 = vunpack.c.l.b16 %v158
  %v575 = vpack.c.b16 %v464, %v463
  %v576 = vpack.c.b16 %v466, %v465
  %v577 = vpack.c.b16 %v468, %v467
  %v578 = vpack.c.b16 %v470, %v469
  %v579 = vpack.c.b16 %v472, %v471
  %v580 = vpack.c.b16 %v474, %v473
  %v581 = vpack.c.b16 %v476, %v475
  %v582 = vpack.c.b16 %v478, %v477
  %v583 = vpack.c.b16 %v480, %v479
  %v584 = vpack.c.b16 %v482, %v481
  %v585 = vpack.c.b16 %v484, %v483
  %v586 = vpack.c.b16 %v486, %v485
  %v587 = vpack.c.b16 %v488, %v487
  %v588 = vpack.c.b16 %v490, %v489
  %v589 = vpack.c.b16 %v492, %v491
  %v590 = vpack.c.b16 %v494, %v493
  %v591 = vpack.c.b16 %v496, %v495
  %v592 = vpack.c.b16 %v498, %v497
  %v593 = vpack.c.b16 %v500, %v499
  %v594 = vpack.c.b16 %v502, %v501
  %v595 = vpack.c.b16 %v504, %v503
  %v596 = vpack.c.b16 %v506, %v505
  %v597 = vpack.c.b16 %v508, %v507
  %v598 = vpack.c.b16 %v510, %v509
  %v599 = vpack.c.b16 %v512, %v511
  %v600 = vpack.c.b16 %v514, %v513
  %v601 = vpack.c.b16 %v516, %v515
  %v602 = vpack.c.b16 %v518, %v517
  %v603 = vpack.c.b16 %v520, %v519
  %v604 = vpack.c.b16 %v522, %v521
  %v605 = vpack.c.b16 %v524, %v523
  %v606 = vpack.c.b16 %v526, %v525
  %v607 = vpack.c.b16 %v528, %v527
  %v608 = vpack.c.b16 %v530, %v529
  %v609 = vpack.c.b16 %v532, %v531
  %v610 = vpack.c.b16 %v534, %v533
  %v611 = vpack.c.b16 %v536, %v535
  %v612 = vpack.c.b16 %v538, %v537
  %v613 = vpack.c.b16 %v540, %v539
  %v614 = vpack.c.b16 %v542, %v541
  %v615 = vpack.c.b16 %v544, %v543
  %v616 = vpack.c.b16 %v546, %v545
  %v617 = vpack.c.b16 %v548, %v547
  %v618 = vpack.c.b16 %v550, %v549
  %v619 = vpack.c.b16 %v552, %v551
  %v620 = vpack.c.b16 %v554, %v553
  %v621 = vpack.c.b16 %v556, %v555
  %v622 = vpack.c.b16 %v558, %v557
  %v623 = vpack.c.b16 %v560, %v559
  %v624 = vpack.c.b16 %v562, %v561
  %v625 = vpack.c.b16 %v564, %v563
  %v626 = vpack.c.b16 %v566, %v565
  %v627 = vpack.c.b16 %v568, %v567
  %v628 = vpack.c.b16 %v570, %v569
  %v629 = vpack.c.b16 %v572, %v571
  %v630 = vpack.c.b16 %v574, %v573
  %687 = vmatprep.subr.bf16.mxu0 0
  %688 = vmatpush1.bf16.msra.mxu0 %v582
  %689 = vmatprep.subr.bf16.mxu0 0
  %690 = vmatpush1.bf16.msra.mxu0 %v581
  %691 = vmatprep.subr.bf16.mxu0 0
  %692 = vmatpush1.bf16.msra.mxu0 %v580
  %693 = vmatprep.subr.bf16.mxu0 0
  %694 = vmatpush1.bf16.msra.mxu0 %v579
  %695 = vmatprep.subr.bf16.mxu0 0
  %696 = vmatpush1.bf16.msra.mxu0 %v578
  %697 = vmatprep.subr.bf16.mxu0 0
  %698 = vmatpush1.bf16.msra.mxu0 %v577
  %699 = vmatprep.subr.bf16.mxu0 0
  %700 = vmatpush1.bf16.msra.mxu0 %v576
  %701 = vmatprep.subr.bf16.mxu0 0
  %702 = vmatpush1.bf16.msra.mxu0 %v575
  %703 = vmatprep.subr.bf16.mxu0 0
  %704 = vmatpush2.bf16.msra.mxu0 %v590
  %705 = vmatprep.subr.bf16.mxu0 0
  %706 = vmatpush2.bf16.msra.mxu0 %v589
  %707 = vmatprep.subr.bf16.mxu0 0
  %708 = vmatpush2.bf16.msra.mxu0 %v588
  %709 = vmatprep.subr.bf16.mxu0 0
  %710 = vmatpush2.bf16.msra.mxu0 %v587
  %711 = vmatprep.subr.bf16.mxu0 0
  %712 = vmatpush2.bf16.msra.mxu0 %v586
  %713 = vmatprep.subr.bf16.mxu0 0
  %714 = vmatpush2.bf16.msra.mxu0 %v585
  %715 = vmatprep.subr.bf16.mxu0 0
  %716 = vmatpush2.bf16.msra.mxu0 %v584
  %717 = vmatprep.subr.bf16.mxu0 0
  %718 = vmatpush2.bf16.msra.mxu0 %v583
  %719 = vmatprep.mubr.bf16.mxu0 %v296
  %720 = vmatmul.mubr.bf16.gmra.mxu0 %v295
  %v721 = vpop.f32.mrf.mxu0
  %v722 = vadd.f32 %v170, %v721
  %v723 = vpop.f32.mrf.mxu0
  %v724 = vpop.f32.mrf.mxu0
  %v725 = vadd.f32 %v175, %v724
  %v726 = vpop.f32.mrf.mxu0
  %727 = vmatprep.mubr.bf16.mxu0 %v303
  %728 = vmatmul.mubr.bf16.gmra.mxu0 %v302
  %v729 = vpop.f32.mrf.mxu0
  %v730 = vadd.f32 %v180, %v729
  %v731 = vpop.f32.mrf.mxu0
  %v732 = vpop.f32.mrf.mxu0
  %v733 = vadd.f32 %v185, %v732
  %v734 = vpop.f32.mrf.mxu0
  %735 = vmatprep.mubr.bf16.mxu0 %v310
  %736 = vmatmul.mubr.bf16.gmra.mxu0 %v309
  %v737 = vpop.f32.mrf.mxu0
  %v738 = vadd.f32 %v190, %v737
  %v739 = vpop.f32.mrf.mxu0
  %v740 = vpop.f32.mrf.mxu0
  %v741 = vadd.f32 %v195, %v740
  %v742 = vpop.f32.mrf.mxu0
  %743 = vmatprep.mubr.bf16.mxu0 %v317
  %744 = vmatmul.mubr.bf16.gmra.mxu0 %v316
  %v745 = vpop.f32.mrf.mxu0
  %v746 = vadd.f32 %v200, %v745
  %v747 = vpop.f32.mrf.mxu0
  %v748 = vpop.f32.mrf.mxu0
  %v749 = vadd.f32 %v205, %v748
  %v750 = vpop.f32.mrf.mxu0
  %751 = vdwg.mxu0
  %752 = vmatprep.subr.bf16.mxu0 0
  %753 = vmatpush1.bf16.msra.mxu0 %v598
  %754 = vmatprep.subr.bf16.mxu0 0
  %755 = vmatpush1.bf16.msra.mxu0 %v597
  %756 = vmatprep.subr.bf16.mxu0 0
  %757 = vmatpush1.bf16.msra.mxu0 %v596
  %758 = vmatprep.subr.bf16.mxu0 0
  %759 = vmatpush1.bf16.msra.mxu0 %v595
  %760 = vmatprep.subr.bf16.mxu0 0
  %761 = vmatpush1.bf16.msra.mxu0 %v594
  %762 = vmatprep.subr.bf16.mxu0 0
  %763 = vmatpush1.bf16.msra.mxu0 %v593
  %764 = vmatprep.subr.bf16.mxu0 0
  %765 = vmatpush1.bf16.msra.mxu0 %v592
  %766 = vmatprep.subr.bf16.mxu0 0
  %767 = vmatpush1.bf16.msra.mxu0 %v591
  %768 = vmatprep.subr.bf16.mxu0 0
  %769 = vmatpush2.bf16.msra.mxu0 %v606
  %770 = vmatprep.subr.bf16.mxu0 0
  %771 = vmatpush2.bf16.msra.mxu0 %v605
  %772 = vmatprep.subr.bf16.mxu0 0
  %773 = vmatpush2.bf16.msra.mxu0 %v604
  %774 = vmatprep.subr.bf16.mxu0 0
  %775 = vmatpush2.bf16.msra.mxu0 %v603
  %776 = vmatprep.subr.bf16.mxu0 0
  %777 = vmatpush2.bf16.msra.mxu0 %v602
  %778 = vmatprep.subr.bf16.mxu0 0
  %779 = vmatpush2.bf16.msra.mxu0 %v601
  %780 = vmatprep.subr.bf16.mxu0 0
  %781 = vmatpush2.bf16.msra.mxu0 %v600
  %782 = vmatprep.subr.bf16.mxu0 0
  %783 = vmatpush2.bf16.msra.mxu0 %v599
  %784 = vmatprep.mubr.bf16.mxu0 %v298
  %785 = vmatmul.mubr.bf16.gmra.mxu0 %v297
  %v786 = vpop.f32.mrf.mxu0
  %v787 = vadd.f32 %v722, %v786
  %v788 = vpop.f32.mrf.mxu0
  %v789 = vpop.f32.mrf.mxu0
  %v790 = vadd.f32 %v725, %v789
  %v791 = vpop.f32.mrf.mxu0
  %792 = vmatprep.mubr.bf16.mxu0 %v305
  %793 = vmatmul.mubr.bf16.gmra.mxu0 %v304
  %v794 = vpop.f32.mrf.mxu0
  %v795 = vadd.f32 %v730, %v794
  %v796 = vpop.f32.mrf.mxu0
  %v797 = vpop.f32.mrf.mxu0
  %v798 = vadd.f32 %v733, %v797
  %v799 = vpop.f32.mrf.mxu0
  %800 = vmatprep.mubr.bf16.mxu0 %v312
  %801 = vmatmul.mubr.bf16.gmra.mxu0 %v311
  %v802 = vpop.f32.mrf.mxu0
  %v803 = vadd.f32 %v738, %v802
  %v804 = vpop.f32.mrf.mxu0
  %v805 = vpop.f32.mrf.mxu0
  %v806 = vadd.f32 %v741, %v805
  %v807 = vpop.f32.mrf.mxu0
  %808 = vmatprep.mubr.bf16.mxu0 %v319
  %809 = vmatmul.mubr.bf16.gmra.mxu0 %v318
  %v810 = vpop.f32.mrf.mxu0
  %v811 = vadd.f32 %v746, %v810
  %v812 = vpop.f32.mrf.mxu0
  %v813 = vpop.f32.mrf.mxu0
  %v814 = vadd.f32 %v749, %v813
  %v815 = vpop.f32.mrf.mxu0
  %816 = vdwg.mxu0
  %817 = vmatprep.subr.bf16.mxu0 0
  %818 = vmatpush1.bf16.msra.mxu0 %v614
  %819 = vmatprep.subr.bf16.mxu0 0
  %820 = vmatpush1.bf16.msra.mxu0 %v613
  %821 = vmatprep.subr.bf16.mxu0 0
  %822 = vmatpush1.bf16.msra.mxu0 %v612
  %823 = vmatprep.subr.bf16.mxu0 0
  %824 = vmatpush1.bf16.msra.mxu0 %v611
  %825 = vmatprep.subr.bf16.mxu0 0
  %826 = vmatpush1.bf16.msra.mxu0 %v610
  %827 = vmatprep.subr.bf16.mxu0 0
  %828 = vmatpush1.bf16.msra.mxu0 %v609
  %829 = vmatprep.subr.bf16.mxu0 0
  %830 = vmatpush1.bf16.msra.mxu0 %v608
  %831 = vmatprep.subr.bf16.mxu0 0
  %832 = vmatpush1.bf16.msra.mxu0 %v607
  %833 = vmatprep.subr.bf16.mxu0 0
  %834 = vmatpush2.bf16.msra.mxu0 %v622
  %835 = vmatprep.subr.bf16.mxu0 0
  %836 = vmatpush2.bf16.msra.mxu0 %v621
  %837 = vmatprep.subr.bf16.mxu0 0
  %838 = vmatpush2.bf16.msra.mxu0 %v620
  %839 = vmatprep.subr.bf16.mxu0 0
  %840 = vmatpush2.bf16.msra.mxu0 %v619
  %841 = vmatprep.subr.bf16.mxu0 0
  %842 = vmatpush2.bf16.msra.mxu0 %v618
  %843 = vmatprep.subr.bf16.mxu0 0
  %844 = vmatpush2.bf16.msra.mxu0 %v617
  %845 = vmatprep.subr.bf16.mxu0 0
  %846 = vmatpush2.bf16.msra.mxu0 %v616
  %847 = vmatprep.subr.bf16.mxu0 0
  %848 = vmatpush2.bf16.msra.mxu0 %v615
  %849 = vmatprep.mubr.bf16.mxu0 %v300
  %850 = vmatmul.mubr.bf16.gmra.mxu0 %v299
  %v851 = vpop.f32.mrf.mxu0
  %v852 = vadd.f32 %v787, %v851
  %v853 = vpop.f32.mrf.mxu0
  %v854 = vpop.f32.mrf.mxu0
  %v855 = vadd.f32 %v790, %v854
  %v856 = vpop.f32.mrf.mxu0
  %857 = vmatprep.mubr.bf16.mxu0 %v307
  %858 = vmatmul.mubr.bf16.gmra.mxu0 %v306
  %v859 = vpop.f32.mrf.mxu0
  %v860 = vadd.f32 %v795, %v859
  %v861 = vpop.f32.mrf.mxu0
  %v862 = vpop.f32.mrf.mxu0
  %v863 = vadd.f32 %v798, %v862
  %v864 = vpop.f32.mrf.mxu0
  %865 = vmatprep.mubr.bf16.mxu0 %v314
  %866 = vmatmul.mubr.bf16.gmra.mxu0 %v313
  %v867 = vpop.f32.mrf.mxu0
  %v868 = vadd.f32 %v803, %v867
  %v869 = vpop.f32.mrf.mxu0
  %v870 = vpop.f32.mrf.mxu0
  %v871 = vadd.f32 %v806, %v870
  %v872 = vpop.f32.mrf.mxu0
  %873 = vmatprep.mubr.bf16.mxu0 %v321
  %874 = vmatmul.mubr.bf16.gmra.mxu0 %v320
  %v875 = vpop.f32.mrf.mxu0
  %v876 = vadd.f32 %v811, %v875
  %v877 = vpop.f32.mrf.mxu0
  %v878 = vpop.f32.mrf.mxu0
  %v879 = vadd.f32 %v814, %v878
  %v880 = vpop.f32.mrf.mxu0
  %881 = vdwg.mxu0
  %882 = vmatprep.subr.bf16.mxu0 0
  %883 = vmatpush1.bf16.msra.mxu0 %v630
  %884 = vmatprep.subr.bf16.mxu0 0
  %885 = vmatpush1.bf16.msra.mxu0 %v629
  %886 = vmatprep.subr.bf16.mxu0 0
  %887 = vmatpush1.bf16.msra.mxu0 %v628
  %888 = vmatprep.subr.bf16.mxu0 0
  %889 = vmatpush1.bf16.msra.mxu0 %v627
  %890 = vmatprep.subr.bf16.mxu0 0
  %891 = vmatpush1.bf16.msra.mxu0 %v626
  %892 = vmatprep.subr.bf16.mxu0 0
  %893 = vmatpush1.bf16.msra.mxu0 %v625
  %894 = vmatprep.subr.bf16.mxu0 0
  %895 = vmatpush1.bf16.msra.mxu0 %v624
  %896 = vmatprep.subr.bf16.mxu0 0
  %897 = vmatpush1.bf16.msra.mxu0 %v623
  %898 = vmatprep.subr.bf16.mxu0 0
  %899 = vmatpush2.bf16.msra.mxu0 0
  %900 = vmatprep.subr.bf16.mxu0 0
  %901 = vmatpush2.bf16.msra.mxu0 0
  %902 = vmatprep.subr.bf16.mxu0 0
  %903 = vmatpush2.bf16.msra.mxu0 0
  %904 = vmatprep.subr.bf16.mxu0 0
  %905 = vmatpush2.bf16.msra.mxu0 0
  %906 = vmatprep.subr.bf16.mxu0 0
  %907 = vmatpush2.bf16.msra.mxu0 0
  %908 = vmatprep.subr.bf16.mxu0 0
  %909 = vmatpush2.bf16.msra.mxu0 0
  %910 = vmatprep.subr.bf16.mxu0 0
  %911 = vmatpush2.bf16.msra.mxu0 0
  %912 = vmatprep.subr.bf16.mxu0 0
  %913 = vmatpush2.bf16.msra.mxu0 0
  %914 = vmatprep.mubr.bf16.mxu0 0
  %915 = vmatmul.mubr.bf16.gmra.mxu0 %v301
  %v916 = vpop.f32.mrf.mxu0
  %v917 = vadd.f32 %v852, %v916
  %v918 = vpop.f32.mrf.mxu0
  %v919 = vpop.f32.mrf.mxu0
  %v920 = vadd.f32 %v855, %v919
  %v921 = vpop.f32.mrf.mxu0
  %922 = vmatprep.mubr.bf16.mxu0 0
  %923 = vmatmul.mubr.bf16.gmra.mxu0 %v308
  %v924 = vpop.f32.mrf.mxu0
  %v925 = vadd.f32 %v860, %v924
  %v926 = vpop.f32.mrf.mxu0
  %v927 = vpop.f32.mrf.mxu0
  %v928 = vadd.f32 %v863, %v927
  %v929 = vpop.f32.mrf.mxu0
  %930 = vmatprep.mubr.bf16.mxu0 0
  %931 = vmatmul.mubr.bf16.gmra.mxu0 %v315
  %v932 = vpop.f32.mrf.mxu0
  %v933 = vadd.f32 %v868, %v932
  %v934 = vpop.f32.mrf.mxu0
  %v935 = vpop.f32.mrf.mxu0
  %v936 = vadd.f32 %v871, %v935
  %v937 = vpop.f32.mrf.mxu0
  %938 = vmatprep.mubr.bf16.mxu0 0
  %939 = vmatmul.mubr.bf16.gmra.mxu0 %v322
  %v940 = vpop.f32.mrf.mxu0
  %v941 = vadd.f32 %v876, %v940
  %v942 = vpop.f32.mrf.mxu0
  %v943 = vpop.f32.mrf.mxu0
  %v944 = vadd.f32 %v879, %v943
  %v945 = vpop.f32.mrf.mxu0
  %946 = vdwg.mxu0
  %v947 = vmax.f32 %v917, 0.0
  %v948 = vmax.f32 %v920, 0.0
  %v949 = vmax.f32 %v925, 0.0
  %v950 = vmax.f32 %v928, 0.0
  %v951 = vmax.f32 %v933, 0.0
  %v952 = vmax.f32 %v936, 0.0
  %v953 = vmax.f32 %v941, 0.0
  %v954 = vmax.f32 %v944, 0.0
  %v955 = vpack.c.bf16 %v948, %v947
  %v956 = vpack.c.bf16 %v950, %v949
  %v957 = vpack.c.bf16 %v952, %v951
  %v958 = vpack.c.bf16 %v954, %v953
  %v963 = vunpack.c.l.b16 %v955
  %v964 = vunpack.c.h.b16 %v955
  %v965 = vunpack.c.l.b16 %v956
  %v966 = vunpack.c.h.b16 %v956
  %v967 = vunpack.c.l.b16 %v957
  %v968 = vunpack.c.h.b16 %v957
  %v969 = vunpack.c.l.b16 %v958
  %v970 = vunpack.c.h.b16 %v958
  %v971 = vpack.c.b16 %v963, %v963
  %v972 = vpack.c.b16 %v964, %v964
  %v973 = vpack.c.b16 %v965, %v965
  %v974 = vpack.c.b16 %v966, %v966
  %v975 = vpack.c.b16 %v967, %v967
  %v976 = vpack.c.b16 %v968, %v968
  %v977 = vpack.c.b16 %v969, %v969
  %v978 = vpack.c.b16 %v970, %v970
  %987 = vst [vmem:[%s3] sm:$0xf] %v971
  %988 = vst [vmem:[%s3 + $0x4] sm:$0xf] %v972
  %989 = vst [vmem:[%s3 + $0x8] sm:$0xf] %v973
  %990 = vst [vmem:[%s3 + $0xc] sm:$0xf] %v974
  %991 = vst [vmem:[%s3 + $0x10] sm:$0xf] %v975
  %992 = vst [vmem:[%s3 + $0x14] sm:$0xf] %v976
  %993 = vst [vmem:[%s3 + $0x18] sm:$0xf] %v977
  %994 = vst [vmem:[%s3 + $0x1c] sm:$0xf] %v978
  // Predicated region
  $region14: #{forward.4} parent=0 // pred_check
    _
  $region15: #{forward.4} parent=0 // pred_check_branch
    %996 = sbr.rel (0) target = $region17
  $region16: #{forward.4} parent=0 // pred_region
    _
  $region17: #{forward.4} parent=0 // pred_fallthru
    _
  // Predicated region
  $region18: #{forward.4} parent=0 // pred_check
    _
  $region19: #{forward.4} parent=0 // pred_check_branch
    %998 = sbr.rel (0) target = $region21
  $region20: #{forward.4} parent=0 // pred_region
    _
  $region21: #{forward.4} parent=0 // pred_fallthru
    _

// kernel: forward.5
$region0: #{forward.5}
  #allocation0 [shape = 'u32[]', space=smem, size = 0x4, offset = 0x4, fixed_abs, tag = 'smem constant byte address 0x4 - core index']
  #allocation1 [shape = 'u32[144,128]{1,0:T(1,128)}', space=vmem, size = 0x12000, scoped, tag = 'internal scratch']
  #allocation2 [shape = 'f32[8,32]{1,0:T(8,128)}', space=vmem, size = 0x1000, scoped, tag = 'scratch operand']
  %s0 = inlined_call_operand.vmem [shape: bf16[8,128], index: 0, kind: input, shape index: {}]
  %s1 = inlined_call_operand.vmem [shape: bf16[128,32], index: 1, kind: input, shape index: {}]
  %s2 = inlined_call_operand.vmem [shape: f32[1,32], index: 2, kind: input, shape index: {}]
  %s3 = inlined_call_operand.vmem [shape: bf16[32,16], index: 3, kind: input, shape index: {}]
  %s4 = inlined_call_operand.vmem [shape: f32[1,16], index: 4, kind: input, shape index: {}]
  %s5 = inlined_call_operand.vmem [shape: bf16[16,4], index: 5, kind: input, shape index: {}]
  %s6 = inlined_call_operand.vmem [shape: f32[1,4], index: 6, kind: input, shape index: {}]
  %s7 = inlined_call_operand.vmem [shape: f32[8,4], index: 7, kind: output, shape index: {}]
  %s8 = sld [smem:[#allocation0]]
  $region46: #{forward.5} parent=0
    _
  %s10 = ssub.s32 1, %s8
  %s11 = scalar_select 0, %s10, %s8
  // Predicated region
  $region2: #{forward.5} parent=0 // pred_check
    _
  $region3: #{forward.5} parent=0 // pred_check_branch
    %13 = sbr.rel (0) target = $region5
  $region4: #{forward.5} parent=0 // pred_region
    _
  $region5: #{forward.5} parent=0 // pred_fallthru
    _
  // Predicated region
  $region6: #{forward.5} parent=0 // pred_check
    _
  $region7: #{forward.5} parent=0 // pred_check_branch
    %15 = sbr.rel (0) target = $region9
  $region8: #{forward.5} parent=0 // pred_region
    _
  $region9: #{forward.5} parent=0 // pred_fallthru
    _
  // Predicated region
  $region10: #{forward.5} parent=0 // pred_check
    _
  $region11: #{forward.5} parent=0 // pred_check_branch
    %17 = sbr.rel (0) target = $region13
  $region12: #{forward.5} parent=0 // pred_region
    _
  $region13: #{forward.5} parent=0 // pred_fallthru
    _
  // Predicated region
  $region14: #{forward.5} parent=0 // pred_check
    _
  $region15: #{forward.5} parent=0 // pred_check_branch
    %19 = sbr.rel (0) target = $region17
  $region16: #{forward.5} parent=0 // pred_region
    _
  $region17: #{forward.5} parent=0 // pred_fallthru
    _
  // Predicated region
  $region18: #{forward.5} parent=0 // pred_check
    _
  $region19: #{forward.5} parent=0 // pred_check_branch
    %21 = sbr.rel (0) target = $region21
  $region20: #{forward.5} parent=0 // pred_region
    _
  $region21: #{forward.5} parent=0 // pred_fallthru
    _
  // Predicated region
  $region22: #{forward.5} parent=0 // pred_check
    _
  $region23: #{forward.5} parent=0 // pred_check_branch
    %23 = sbr.rel (0) target = $region25
  $region24: #{forward.5} parent=0 // pred_region
    _
  $region25: #{forward.5} parent=0 // pred_fallthru
    _
  // Predicated region
  $region26: #{forward.5} parent=0 // pred_check
    _
  $region27: #{forward.5} parent=0 // pred_check_branch
    %25 = sbr.rel (0) target = $region29
  $region28: #{forward.5} parent=0 // pred_region
    _
  $region29: #{forward.5} parent=0 // pred_fallthru
    _
  %p27 = scmp.eq.s32.totalorder 0, 0
  // Predicated region
  $region30: #{forward.5} parent=0 // pred_check
    %p28 = pneg %p27
  $region31: #{forward.5} parent=0 // pred_check_branch
    %30 = sbr.rel (%p28) target = $region33
  $region32: #{forward.5} parent=0 // pred_region
    %vm31 = vcmask 261120
    %32 = vst.msk [vmem:[#allocation2] sm:$0xff] %vm31, 0.0
  $region33: #{forward.5} parent=0 // pred_fallthru
    _
  %v33 = vld [vmem:[#allocation2] sm:$0xff]
  %v34 = vld [vmem:[%s0] sm:$0xf]
  %v35 = vld [vmem:[%s1] sm:$0xf]
  %v36 = vld [vmem:[%s1 + $0x4] sm:$0xf]
  %v37 = vld [vmem:[%s1 + $0x8] sm:$0xf]
  %v38 = vld [vmem:[%s1 + $0xc] sm:$0xf]
  %v39 = vld [vmem:[%s1 + $0x10] sm:$0xf]
  %v40 = vld [vmem:[%s1 + $0x14] sm:$0xf]
  %v41 = vld [vmem:[%s1 + $0x18] sm:$0xf]
  %v42 = vld [vmem:[%s1 + $0x1c] sm:$0xf]
  %v43 = vld [vmem:[%s1 + $0x20] sm:$0xf]
  %v44 = vld [vmem:[%s1 + $0x24] sm:$0xf]
  %v45 = vld [vmem:[%s1 + $0x28] sm:$0xf]
  %v46 = vld [vmem:[%s1 + $0x2c] sm:$0xf]
  %v47 = vld [vmem:[%s1 + $0x30] sm:$0xf]
  %v48 = vld [vmem:[%s1 + $0x34] sm:$0xf]
  %v49 = vld [vmem:[%s1 + $0x38] sm:$0xf]
  %v50 = vld [vmem:[%s1 + $0x3c] sm:$0xf]
  %v67 = vunpack.c.l.b16 %v35
  %v68 = vunpack.c.l.b16 %v36
  %v69 = vunpack.c.l.b16 %v37
  %v70 = vunpack.c.l.b16 %v38
  %v71 = vunpack.c.l.b16 %v39
  %v72 = vunpack.c.l.b16 %v40
  %v73 = vunpack.c.l.b16 %v41
  %v74 = vunpack.c.l.b16 %v42
  %v75 = vunpack.c.l.b16 %v43
  %v76 = vunpack.c.l.b16 %v44
  %v77 = vunpack.c.l.b16 %v45
  %v78 = vunpack.c.l.b16 %v46
  %v79 = vunpack.c.l.b16 %v47
  %v80 = vunpack.c.l.b16 %v48
  %v81 = vunpack.c.l.b16 %v49
  %v82 = vunpack.c.l.b16 %v50
  %v83 = vpack.c.b16 %v68, %v67
  %v84 = vpack.c.b16 %v70, %v69
  %v85 = vpack.c.b16 %v72, %v71
  %v86 = vpack.c.b16 %v74, %v73
  %v87 = vpack.c.b16 %v76, %v75
  %v88 = vpack.c.b16 %v78, %v77
  %v89 = vpack.c.b16 %v80, %v79
  %v90 = vpack.c.b16 %v82, %v81
  %99 = vmatprep.subr.bf16.mxu0 0
  %100 = vmatpush1.bf16.msra.mxu0 %v90
  %101 = vmatprep.subr.bf16.mxu0 0
  %102 = vmatpush1.bf16.msra.mxu0 %v89
  %103 = vmatprep.subr.bf16.mxu0 0
  %104 = vmatpush1.bf16.msra.mxu0 %v88
  %105 = vmatprep.subr.bf16.mxu0 0
  %106 = vmatpush1.bf16.msra.mxu0 %v87
  %107 = vmatprep.subr.bf16.mxu0 0
  %108 = vmatpush1.bf16.msra.mxu0 %v86
  %109 = vmatprep.subr.bf16.mxu0 0
  %110 = vmatpush1.bf16.msra.mxu0 %v85
  %111 = vmatprep.subr.bf16.mxu0 0
  %112 = vmatpush1.bf16.msra.mxu0 %v84
  %113 = vmatprep.subr.bf16.mxu0 0
  %114 = vmatpush1.bf16.msra.mxu0 %v83
  %115 = vmatprep.subr.bf16.mxu0 0
  %116 = vmatpush2.bf16.msra.mxu0 0
  %117 = vmatprep.subr.bf16.mxu0 0
  %118 = vmatpush2.bf16.msra.mxu0 0
  %119 = vmatprep.subr.bf16.mxu0 0
  %120 = vmatpush2.bf16.msra.mxu0 0
  %121 = vmatprep.subr.bf16.mxu0 0
  %122 = vmatpush2.bf16.msra.mxu0 0
  %123 = vmatprep.subr.bf16.mxu0 0
  %124 = vmatpush2.bf16.msra.mxu0 0
  %125 = vmatprep.subr.bf16.mxu0 0
  %126 = vmatpush2.bf16.msra.mxu0 0
  %127 = vmatprep.subr.bf16.mxu0 0
  %128 = vmatpush2.bf16.msra.mxu0 0
  %129 = vmatprep.subr.bf16.mxu0 0
  %130 = vmatpush2.bf16.msra.mxu0 0
  %131 = vmatprep.mubr.bf16.mxu0 0
  %132 = vmatmul.mubr.bf16.gmra.mxu0 %v34
  %v133 = vpop.f32.mrf.mxu0
  %v134 = vadd.f32 0.0, %v133
  %v135 = vpop.f32.mrf.mxu0
  %v136 = vpop.f32.mrf.mxu0
  %v137 = vpop.f32.mrf.mxu0
  %138 = vdwg.mxu0
  %v139 = vadd.f32 %v33, %v134
  %vm140 = vcmask 261120
  %141 = vst.msk [vmem:[#allocation2] sm:$0xff] %vm140, %v139
  // Predicated region
  $region34: #{forward.5} parent=0 // pred_check
    %p142 = pneg %p27
  $region35: #{forward.5} parent=0 // pred_check_branch
    %144 = sbr.rel (%p142) target = $region37
  $region36: #{forward.5} parent=0 // pred_region
    %v145 = vld [vmem:[#allocation2] sm:$0xff]
    %v146 = vld [vmem:[%s2] sm:$0x1]
    %v148 = vlaneseq
    %v149 = vshrl.u32 %v148, 7
    %v150 = vsub.s32 0, %v149
    %v151 = vrot.slane %v146, %v150
    %v153 = vadd.f32 %v145, %v151
    %v154 = vmax.f32 %v153, 0.0
    %v155 = vpack.c.bf16 %v154, %v154
    %v156 = vld [vmem:[%s3] sm:$0xf]
    %v157 = vld [vmem:[%s3 + $0x4] sm:$0xf]
    %v158 = vld [vmem:[%s3 + $0x8] sm:$0xf]
    %v159 = vld [vmem:[%s3 + $0xc] sm:$0xf]
    %v160 = vld [vmem:[%s4] sm:$0x1]
    %v162 = vlaneseq
    %v163 = vshrl.u32 %v162, 7
    %v164 = vsub.s32 0, %v163
    %v165 = vrot.slane %v160, %v164
    %v171 = vunpack.c.l.b16 %v156
    %v172 = vunpack.c.l.b16 %v157
    %v173 = vunpack.c.l.b16 %v158
    %v174 = vunpack.c.l.b16 %v159
    %v175 = vpack.c.b16 %v172, %v171
    %v176 = vpack.c.b16 %v174, %v173
    %v180 = vsel %vm140, %v155, 0
    %182 = vmatprep.subr.bf16.mxu0 0
    %183 = vmatpush1.bf16.msra.mxu0 0
    %184 = vmatprep.subr.bf16.mxu0 0
    %185 = vmatpush1.bf16.msra.mxu0 0
    %186 = vmatprep.subr.bf16.mxu0 0
    %187 = vmatpush1.bf16.msra.mxu0 0
    %188 = vmatprep.subr.bf16.mxu0 0
    %189 = vmatpush1.bf16.msra.mxu0 0
    %190 = vmatprep.subr.bf16.mxu0 0
    %191 = vmatpush1.bf16.msra.mxu0 0
    %192 = vmatprep.subr.bf16.mxu0 0
    %193 = vmatpush1.bf16.msra.mxu0 0
    %194 = vmatprep.subr.bf16.mxu0 0
    %195 = vmatpush1.bf16.msra.mxu0 %v176
    %196 = vmatprep.subr.bf16.mxu0 0
    %197 = vmatpush1.bf16.msra.mxu0 %v175
    %198 = vmatprep.subr.bf16.mxu0 0
    %199 = vmatpush2.bf16.msra.mxu0 0
    %200 = vmatprep.subr.bf16.mxu0 0
    %201 = vmatpush2.bf16.msra.mxu0 0
    %202 = vmatprep.subr.bf16.mxu0 0
    %203 = vmatpush2.bf16.msra.mxu0 0
    %204 = vmatprep.subr.bf16.mxu0 0
    %205 = vmatpush2.bf16.msra.mxu0 0
    %206 = vmatprep.subr.bf16.mxu0 0
    %207 = vmatpush2.bf16.msra.mxu0 0
    %208 = vmatprep.subr.bf16.mxu0 0
    %209 = vmatpush2.bf16.msra.mxu0 0
    %210 = vmatprep.subr.bf16.mxu0 0
    %211 = vmatpush2.bf16.msra.mxu0 0
    %212 = vmatprep.subr.bf16.mxu0 0
    %213 = vmatpush2.bf16.msra.mxu0 0
    %214 = vmatprep.mubr.bf16.mxu0 0
    %215 = vmatmul.mubr.bf16.gmra.mxu0 %v180
    %v216 = vpop.f32.mrf.mxu0
    %v217 = vadd.f32 %v165, %v216
    %v218 = vpop.f32.mrf.mxu0
    %v219 = vpop.f32.mrf.mxu0
    %v220 = vpop.f32.mrf.mxu0
    %221 = vdwg.mxu0
    %v222 = vmax.f32 %v217, 0.0
    %v223 = vpack.c.bf16 %v222, %v222
    %v224 = vld [vmem:[%s5] sm:$0xf]
    %v225 = vld [vmem:[%s5 + $0x4] sm:$0xf]
    %v226 = vld [vmem:[%s6] sm:$0x1]
    %v228 = vlaneseq
    %v229 = vshrl.u32 %v228, 7
    %v230 = vsub.s32 0, %v229
    %v231 = vrot.slane %v226, %v230
    %v235 = vunpack.c.l.b16 %v224
    %v236 = vunpack.c.l.b16 %v225
    %v237 = vpack.c.b16 %v236, %v235
    %vm239 = vcmask 130048
    %v241 = vsel %vm239, %v223, 0
    %243 = vmatprep.subr.bf16.mxu0 0
    %244 = vmatpush1.bf16.msra.mxu0 0
    %245 = vmatprep.subr.bf16.mxu0 0
    %246 = vmatpush1.bf16.msra.mxu0 0
    %247 = vmatprep.subr.bf16.mxu0 0
    %248 = vmatpush1.bf16.msra.mxu0 0
    %249 = vmatprep.subr.bf16.mxu0 0
    %250 = vmatpush1.bf16.msra.mxu0 0
    %251 = vmatprep.subr.bf16.mxu0 0
    %252 = vmatpush1.bf16.msra.mxu0 0
    %253 = vmatprep.subr.bf16.mxu0 0
    %254 = vmatpush1.bf16.msra.mxu0 0
    %255 = vmatprep.subr.bf16.mxu0 0
    %256 = vmatpush1.bf16.msra.mxu0 0
    %257 = vmatprep.subr.bf16.mxu0 0
    %258 = vmatpush1.bf16.msra.mxu0 %v237
    %259 = vmatprep.subr.bf16.mxu0 0
    %260 = vmatpush2.bf16.msra.mxu0 0
    %261 = vmatprep.subr.bf16.mxu0 0
    %262 = vmatpush2.bf16.msra.mxu0 0
    %263 = vmatprep.subr.bf16.mxu0 0
    %264 = vmatpush2.bf16.msra.mxu0 0
    %265 = vmatprep.subr.bf16.mxu0 0
    %266 = vmatpush2.bf16.msra.mxu0 0
    %267 = vmatprep.subr.bf16.mxu0 0
    %268 = vmatpush2.bf16.msra.mxu0 0
    %269 = vmatprep.subr.bf16.mxu0 0
    %270 = vmatpush2.bf16.msra.mxu0 0
    %271 = vmatprep.subr.bf16.mxu0 0
    %272 = vmatpush2.bf16.msra.mxu0 0
    %273 = vmatprep.subr.bf16.mxu0 0
    %274 = vmatpush2.bf16.msra.mxu0 0
    %275 = vmatprep.mubr.bf16.mxu0 0
    %276 = vmatmul.mubr.bf16.gmra.mxu0 %v241
    %v277 = vpop.f32.mrf.mxu0
    %v278 = vadd.f32 %v231, %v277
    %v279 = vpop.f32.mrf.mxu0
    %v280 = vpop.f32.mrf.mxu0
    %v281 = vpop.f32.mrf.mxu0
    %282 = vdwg.mxu0
    %vm283 = vcmask 31744
    %284 = vst.msk [vmem:[%s7] sm:$0xff] %vm283, %v278
  $region37: #{forward.5} parent=0 // pred_fallthru
    _
  // Predicated region
  $region38: #{forward.5} parent=0 // pred_check
    _
  $region39: #{forward.5} parent=0 // pred_check_branch
    %286 = sbr.rel (0) target = $region41
  $region40: #{forward.5} parent=0 // pred_region
    _
  $region41: #{forward.5} parent=0 // pred_fallthru
    _
  // Predicated region
  $region42: #{forward.5} parent=0 // pred_check
    _
  $region43: #{forward.5} parent=0 // pred_check_branch
    %288 = sbr.rel (0) target = $region45
  $region44: #{forward.5} parent=0 // pred_region
    _
  $region45: #{forward.5} parent=0 // pred_fallthru
    _

</llo_original>
